<compile_context>
chip_gen: v5e
topology: v5e:2x2
jax: 0.10.0
libtpu: 0.0.40
codegen_flags: <defaults>
</compile_context>

<pallas_src>
import math

import jax
import jax.numpy as jnp
from jax import lax
from jax.experimental import pallas as pl
from jax.experimental.pallas import tpu as pltpu

EPS = 1e-5  # torch.nn.BatchNorm2d default eps


def _round_up(v, m):
    return (v + m - 1) // m * m


# ------------------------------ Pallas kernel -------------------------------- #

def _make_kernel(B, Cin, Chid, W, HW, FRONT, CP):
    BHW = B * HW
    inv_n = 1.0 / float(BHW)

    def batchnorm_relu(v, g_ref, b_ref):
        # Training-mode BatchNorm2d: per-channel stats over (B, H, W) = lane axis.
        # One-pass sum / sum-of-squares in f32 (biased variance, like torch).
        s = jnp.sum(v, axis=1, keepdims=True)
        q = jnp.sum(v * v, axis=1, keepdims=True)
        m = s * inv_n
        var = jnp.maximum(q * inv_n - m * m, 0.0)
        y = (v - m) * lax.rsqrt(var + EPS) * g_ref[...] + b_ref[...]
        return jnp.maximum(y, 0.0)

    def kernel(x_ref, w1_ref, b1_ref, w2_ref, b2_ref, wsc_ref, bsc_ref,
               g1_ref, be1_ref, g2_ref, be2_ref, masks_ref,
               o_ref, pad_ref, cols_ref):

        # One-time zero fill: the halo lanes of pad_ref and the channel-pad rows of
        # cols_ref are never written afterwards, so they stay exactly 0.0 for both
        # convolutions (padded weight rows are zero too, so pads never contribute).
        pad_ref[...] = jnp.zeros_like(pad_ref)
        cols_ref[...] = jnp.zeros_like(cols_ref)

        def conv3x3(a, w_ref, C):
            """3x3 'same' conv of a (C, B*HW) activation with w_ref (Co, 9*CP).

            One aligned store of the whole activation into the zero-haloed flat
            buffer, nine statically shifted slice reads (one per tap) masked by the
            per-tap validity row, then a single MXU matmul (K = 9*CP, N = B*HW).
            """
            pad_ref[0:C, FRONT:FRONT + BHW] = a
            for dh in (-1, 0, 1):
                for dw in (-1, 0, 1):
                    tap = (dh + 1) * 3 + (dw + 1)          # = kh*3 + kw
                    start = FRONT + dh * W + dw
                    sl = pad_ref[0:C, start:start + BHW]
                    cols_ref[tap * CP:tap * CP + C, :] = (
                        sl * masks_ref[tap:tap + 1, :])
            return jnp.dot(w_ref[...], cols_ref[...],
                           preferred_element_type=jnp.float32)

        x = x_ref[...]                                      # (Cin, B*HW)

        a1 = batchnorm_relu(x, g1_ref, be1_ref)             # relu(bn1(x))
        y1 = conv3x3(a1, w1_ref, Cin) + b1_ref[...]         # conv1

        a2 = batchnorm_relu(y1, g2_ref, be2_ref)            # relu(bn2(.))
        y2 = conv3x3(a2, w2_ref, Chid) + b2_ref[...]        # conv2

        # Shortcut: 1x1 conv = plain matmul over channels.
        res = jnp.dot(wsc_ref[...], x,
                      preferred_element_type=jnp.float32) + bsc_ref[...]

        o_ref[...] = y2 + res

    return kernel


# ------------------------------ wrapper -------------------------------------- #

def res_block_g_forward(x, w1, b1, w2, b2, w_sc, b_sc, g1, beta1, g2, beta2):
    """ResBlockG forward (upsample=False). x: (B, Cin, H, W) NCHW."""
    B, Cin, H, W = x.shape
    Chid = w1.shape[0]
    Cout = w2.shape[0]
    HW = H * W
    BHW = B * HW

    # Flat-spatial halo geometry (global, shared by all samples):
    #   [FRONT zeros | B*H*W pixels | BACK zeros],   FRONT/BACK >= W+1, lane aligned.
    FRONT = _round_up(W + 1, 128)
    BACK = _round_up(W + 1, 128)
    PADL = FRONT + BHW + BACK
    CP = _round_up(max(Cin, Chid), 8)     # per-tap channel block, padded to 8 sublanes

    f32 = jnp.float32
    # Channels in sublanes, batch folded into the flattened (lane-dense) spatial axis.
    x2d = jnp.transpose(x, (1, 0, 2, 3)).reshape(Cin, BHW).astype(f32)

    def pack_w(w):
        # (Co, Ci, 3, 3) -> (Co, 9*CP), tap-major, channel rows zero-padded to CP.
        Co, Ci, kh, kw = w.shape
        wt = jnp.transpose(w, (0, 2, 3, 1)).reshape(Co, kh * kw, Ci).astype(f32)
        wt = jnp.pad(wt, ((0, 0), (0, 0), (0, CP - Ci)))
        return wt.reshape(Co, kh * kw * CP)

    w1p = pack_w(w1)
    w2p = pack_w(w2)
    wscf = w_sc.reshape(Cout, Cin).astype(f32)
    b1c = b1.reshape(Chid, 1).astype(f32)
    b2c = b2.reshape(Cout, 1).astype(f32)
    bscc = b_sc.reshape(Cout, 1).astype(f32)
    g1c = g1.reshape(Cin, 1).astype(f32)
    be1c = beta1.reshape(Cin, 1).astype(f32)
    g2c = g2.reshape(Chid, 1).astype(f32)
    be2c = beta2.reshape(Chid, 1).astype(f32)

    # Per-tap validity masks (1.0 = keep): row tap = (dh+1)*3+(dw+1); a position is
    # valid iff its (i+dh, j+dw) neighbour lies inside the same image.  This also
    # kills cross-sample reads through the shared flat halo buffer.
    idx = jnp.arange(BHW, dtype=jnp.int32)
    ii = (idx % HW) // W
    jj = idx % W
    rows = []
    for dh in (-1, 0, 1):
        for dw in (-1, 0, 1):
            valid = ((ii + dh >= 0) & (ii + dh <= H - 1) &
                     (jj + dw >= 0) & (jj + dw <= W - 1))
            rows.append(valid.astype(f32))
    masks = jnp.stack(rows, axis=0)                      # (9, BHW)

    operands = (x2d, w1p, b1c, w2p, b2c, wscf, bscc,
                g1c, be1c, g2c, be2c, masks)

    def full_spec(a):
        nd = a.ndim
        return pl.BlockSpec(tuple(a.shape), lambda i, _nd=nd: (0,) * _nd)

    in_specs = [full_spec(a) for a in operands]
    out_spec = pl.BlockSpec((Cout, BHW), lambda i: (0, 0))

    Cmax = max(Cin, Chid)
    scratch_shapes = [
        pltpu.VMEM((Cmax, PADL), f32),    # zero-haloed flat activation buffer
        pltpu.VMEM((9 * CP, BHW), f32),   # im2col columns (tap-major, channel-padded)
    ]

    in_bytes = sum(int(a.size) * 4 for a in operands)
    out_bytes = Cout * BHW * 4
    scratch_bytes = (Cmax * PADL + 9 * CP * BHW) * 4
    vmem_limit = int(min(64 * 1024 * 1024,
                         max(8 * 1024 * 1024,
                             4 * (in_bytes + out_bytes) + 2 * scratch_bytes)))

    flops = 2 * BHW * (Chid * 9 * Cin + Cout * 9 * Chid + Cout * Cin)
    cost = pl.CostEstimate(flops=flops, transcendentals=Cin + Chid,
                           bytes_accessed=in_bytes + out_bytes)

    kernel = _make_kernel(B, Cin, Chid, W, HW, FRONT, CP)

    out2d = pl.pallas_call(
        kernel,
        out_shape=jax.ShapeDtypeStruct((Cout, BHW), f32),
        grid=(1,),
        in_specs=in_specs,
        out_specs=out_spec,
        scratch_shapes=scratch_shapes,
        compiler_params=pltpu.CompilerParams(
            dimension_semantics=("arbitrary",),
            vmem_limit_bytes=vmem_limit),
        cost_estimate=cost,
    )(*operands)

    return jnp.transpose(out2d.reshape(Cout, B, H, W), (1, 0, 2, 3))


# ------------------------------ reference ------------------------------------ #

def reference_forward(x, w1, b1, w2, b2, w_sc, b_sc, g1, beta1, g2, beta2):
    """Pure-JAX reference matching the PyTorch module (training-mode BatchNorm)."""
    def bn_train(v, g, b):
        m = jnp.mean(v, axis=(0, 2, 3), keepdims=True)
        var = jnp.mean((v - m) ** 2, axis=(0, 2, 3), keepdims=True)
        return ((v - m) * lax.rsqrt(var + EPS) * g.reshape(1, -1, 1, 1)
                + b.reshape(1, -1, 1, 1))

    def conv(v, w, bias, pad):
        y = lax.conv_general_dilated(
            v, w, window_strides=(1, 1), padding=[(pad, pad), (pad, pad)],
            dimension_numbers=("NCHW", "OIHW", "NCHW"),
            precision=lax.Precision.HIGHEST)
        return y + bias.reshape(1, -1, 1, 1)

    h = jnp.maximum(bn_train(x, g1, beta1), 0.0)
    h = conv(h, w1, b1, 1)
    h = jnp.maximum(bn_train(h, g2, beta2), 0.0)
    h = conv(h, w2, b2, 1)
    res = conv(x, w_sc, b_sc, 0)
    return h + res


# ------------------------------ main ------------------------------------------ #

if __name__ == "__main__":
    # TODO(synk): nn.UpsamplingBilinear2d path (upsample=True) is not implemented; the
    # default upsample=False forward is what is ported here.
    # TODO(synk): BatchNorm2d running_mean/var updates are a training-time side effect
    # that does not change this forward output; not implemented.
    B, Cin, Cout, H, W = 2, 4, 8, 16, 16
    Chid = Cin        # ResBlockG forces hidden_channels = in_channels
    K = 3

    key = jax.random.PRNGKey(0)
    ks = jax.random.split(key, 11)

    x = jax.random.normal(ks[0], (B, Cin, H, W), jnp.float32)

    bnd1 = 1.0 / math.sqrt(Cin * K * K)
    w1 = jax.random.uniform(ks[1], (Chid, Cin, K, K), jnp.float32, -bnd1, bnd1)
    b1 = jax.random.uniform(ks[2], (Chid,), jnp.float32, -bnd1, bnd1)
    bnd2 = 1.0 / math.sqrt(Chid * K * K)
    w2 = jax.random.uniform(ks[3], (Cout, Chid, K, K), jnp.float32, -bnd2, bnd2)
    b2 = jax.random.uniform(ks[4], (Cout,), jnp.float32, -bnd2, bnd2)
    bnds = 1.0 / math.sqrt(Cin)
    w_sc = jax.random.uniform(ks[5], (Cout, Cin, 1, 1), jnp.float32, -bnds, bnds)
    b_sc = jax.random.uniform(ks[6], (Cout,), jnp.float32, -bnds, bnds)
    # BatchNorm affine params (torch init is ones/zeros; use nontrivial values)
    g1 = 1.0 + 0.1 * jax.random.normal(ks[7], (Cin,), jnp.float32)
    beta1 = 0.1 * jax.random.normal(ks[8], (Cin,), jnp.float32)
    g2 = 1.0 + 0.1 * jax.random.normal(ks[9], (Chid,), jnp.float32)
    beta2 = 0.1 * jax.random.normal(ks[10], (Chid,), jnp.float32)

    out = res_block_g_forward(x, w1, b1, w2, b2, w_sc, b_sc, g1, beta1, g2, beta2)
    out = jax.block_until_ready(out)

    ref = jax.block_until_ready(
        reference_forward(x, w1, b1, w2, b2, w_sc, b_sc, g1, beta1, g2, beta2))
    assert out.shape == ref.shape == (B, Cout, H, W)
    err = float(jnp.max(jnp.abs(out - ref)))
    assert err < 2e-3, f"mismatch vs reference: max abs err = {err}"

    print("KERNEL_OK")
</pallas_src>

<mosaic_0001>
module attributes {stable_mosaic.version = 11 : i64} {
  func.func @kernel(%arg0: i32, %arg1: memref<4x512xf32, #tpu.memory_space<vmem>>, %arg2: memref<4x72xf32, #tpu.memory_space<vmem>>, %arg3: memref<4x1xf32, #tpu.memory_space<vmem>>, %arg4: memref<8x72xf32, #tpu.memory_space<vmem>>, %arg5: memref<8x1xf32, #tpu.memory_space<vmem>>, %arg6: memref<8x4xf32, #tpu.memory_space<vmem>>, %arg7: memref<8x1xf32, #tpu.memory_space<vmem>>, %arg8: memref<4x1xf32, #tpu.memory_space<vmem>>, %arg9: memref<4x1xf32, #tpu.memory_space<vmem>>, %arg10: memref<4x1xf32, #tpu.memory_space<vmem>>, %arg11: memref<4x1xf32, #tpu.memory_space<vmem>>, %arg12: memref<9x512xf32, #tpu.memory_space<vmem>>, %arg13: memref<8x512xf32, #tpu.memory_space<vmem>>, %arg14: memref<4x768xf32, #tpu.memory_space<vmem>>, %arg15: memref<72x512xf32, #tpu.memory_space<vmem>>) attributes {dimension_semantics = [#tpu.dimension_semantics<arbitrary>], iteration_bounds = array<i64: 1>, scalar_prefetch = 0 : i64, scratch_operands = 2 : i64, tpu.core_type = #tpu.core_type<tc>, window_params = [{pipeline_mode = #tpu.pipeline_mode<synchronous>, transform_indices = @transform_0, window_bounds = array<i64: 4, 512>}, {pipeline_mode = #tpu.pipeline_mode<synchronous>, transform_indices = @transform_1, window_bounds = array<i64: 4, 72>}, {pipeline_mode = #tpu.pipeline_mode<synchronous>, transform_indices = @transform_2, window_bounds = array<i64: 4, 1>}, {pipeline_mode = #tpu.pipeline_mode<synchronous>, transform_indices = @transform_3, window_bounds = array<i64: 8, 72>}, {pipeline_mode = #tpu.pipeline_mode<synchronous>, transform_indices = @transform_4, window_bounds = array<i64: 8, 1>}, {pipeline_mode = #tpu.pipeline_mode<synchronous>, transform_indices = @transform_5, window_bounds = array<i64: 8, 4>}, {pipeline_mode = #tpu.pipeline_mode<synchronous>, transform_indices = @transform_6, window_bounds = array<i64: 8, 1>}, {pipeline_mode = #tpu.pipeline_mode<synchronous>, transform_indices = @transform_7, window_bounds = array<i64: 4, 1>}, {pipeline_mode = #tpu.pipeline_mode<synchronous>, transform_indices = @transform_8, window_bounds = array<i64: 4, 1>}, {pipeline_mode = #tpu.pipeline_mode<synchronous>, transform_indices = @transform_9, window_bounds = array<i64: 4, 1>}, {pipeline_mode = #tpu.pipeline_mode<synchronous>, transform_indices = @transform_10, window_bounds = array<i64: 4, 1>}, {pipeline_mode = #tpu.pipeline_mode<synchronous>, transform_indices = @transform_11, window_bounds = array<i64: 9, 512>}, {pipeline_mode = #tpu.pipeline_mode<synchronous>, transform_indices = @transform_12, window_bounds = array<i64: 8, 512>}]} {
    %cst = arith.constant 0.000000e+00 : f32
    %0 = vector.broadcast %cst : f32 to vector<4x768xf32>
    %c0 = arith.constant 0 : index
    %c0_0 = arith.constant 0 : index
    %1 = vector.load %arg14[%c0, %c0_0] : memref<4x768xf32, #tpu.memory_space<vmem>>, vector<4x768xf32>
    tpu.vector_store %arg14[%c0, %c0_0], %0 {strides = array<i32>} : memref<4x768xf32, #tpu.memory_space<vmem>>, vector<4x768xf32>,
    %cst_1 = arith.constant 0.000000e+00 : f32
    %2 = vector.broadcast %cst_1 : f32 to vector<72x512xf32>
    %c0_2 = arith.constant 0 : index
    %c0_3 = arith.constant 0 : index
    %3 = vector.load %arg15[%c0_2, %c0_3] : memref<72x512xf32, #tpu.memory_space<vmem>>, vector<72x512xf32>
    tpu.vector_store %arg15[%c0_2, %c0_3], %2 {strides = array<i32>} : memref<72x512xf32, #tpu.memory_space<vmem>>, vector<72x512xf32>,
    %c0_4 = arith.constant 0 : index
    %c0_5 = arith.constant 0 : index
    %4 = vector.load %arg1[%c0_4, %c0_5] : memref<4x512xf32, #tpu.memory_space<vmem>>, vector<4x512xf32>
    %cst_6 = arith.constant dense<0.000000e+00> : vector<4xf32>
    %5 = vector.multi_reduction <add>, %4, %cst_6 [1] : vector<4x512xf32> to vector<4xf32>
    %6 = vector.shape_cast %5 : vector<4xf32> to vector<4x1xf32>
    %7 = arith.mulf %4, %4 : vector<4x512xf32>
    %cst_7 = arith.constant dense<0.000000e+00> : vector<4xf32>
    %8 = vector.multi_reduction <add>, %7, %cst_7 [1] : vector<4x512xf32> to vector<4xf32>
    %9 = vector.shape_cast %8 : vector<4xf32> to vector<4x1xf32>
    %cst_8 = arith.constant 0.001953125 : f32
    %10 = vector.broadcast %cst_8 : f32 to vector<4x1xf32>
    %11 = arith.mulf %6, %10 : vector<4x1xf32>
    %cst_9 = arith.constant 0.001953125 : f32
    %12 = vector.broadcast %cst_9 : f32 to vector<4x1xf32>
    %13 = arith.mulf %9, %12 : vector<4x1xf32>
    %14 = arith.mulf %11, %11 : vector<4x1xf32>
    %15 = arith.subf %13, %14 : vector<4x1xf32>
    %cst_10 = arith.constant 0.000000e+00 : f32
    %16 = vector.broadcast %cst_10 : f32 to vector<4x1xf32>
    %17 = arith.maximumf %15, %16 : vector<4x1xf32>
    %18 = vector.broadcast %11 : vector<4x1xf32> to vector<4x512xf32>
    %19 = arith.subf %4, %18 : vector<4x512xf32>
    %cst_11 = arith.constant 9.99999974E-6 : f32
    %20 = vector.broadcast %cst_11 : f32 to vector<4x1xf32>
    %21 = arith.addf %17, %20 : vector<4x1xf32>
    %22 = math.rsqrt %21 : vector<4x1xf32>
    %23 = vector.broadcast %22 : vector<4x1xf32> to vector<4x512xf32>
    %24 = arith.mulf %19, %23 : vector<4x512xf32>
    %c0_12 = arith.constant 0 : index
    %c0_13 = arith.constant 0 : index
    %25 = vector.load %arg8[%c0_12, %c0_13] : memref<4x1xf32, #tpu.memory_space<vmem>>, vector<4x1xf32>
    %26 = vector.broadcast %25 : vector<4x1xf32> to vector<4x512xf32>
    %27 = arith.mulf %24, %26 : vector<4x512xf32>
    %c0_14 = arith.constant 0 : index
    %c0_15 = arith.constant 0 : index
    %28 = vector.load %arg9[%c0_14, %c0_15] : memref<4x1xf32, #tpu.memory_space<vmem>>, vector<4x1xf32>
    %29 = vector.broadcast %28 : vector<4x1xf32> to vector<4x512xf32>
    %30 = arith.addf %27, %29 : vector<4x512xf32>
    %cst_16 = arith.constant 0.000000e+00 : f32
    %31 = vector.broadcast %cst_16 : f32 to vector<4x512xf32>
    %32 = arith.maximumf %30, %31 : vector<4x512xf32>
    %c0_17 = arith.constant 0 : index
    %c128 = arith.constant 128 : index
    %33 = vector.load %arg14[%c0_17, %c128] : memref<4x768xf32, #tpu.memory_space<vmem>>, vector<4x512xf32>
    tpu.vector_store %arg14[%c0_17, %c128], %32 {strides = array<i32>} : memref<4x768xf32, #tpu.memory_space<vmem>>, vector<4x512xf32>,
    %c0_18 = arith.constant 0 : index
    %c111 = arith.constant 111 : index
    %34 = vector.load %arg14[%c0_18, %c111] : memref<4x768xf32, #tpu.memory_space<vmem>>, vector<4x512xf32>
    %c0_19 = arith.constant 0 : index
    %c0_20 = arith.constant 0 : index
    %35 = vector.load %arg12[%c0_19, %c0_20] : memref<9x512xf32, #tpu.memory_space<vmem>>, vector<1x512xf32>
    %36 = vector.broadcast %35 : vector<1x512xf32> to vector<4x512xf32>
    %37 = arith.mulf %34, %36 : vector<4x512xf32>
    %c0_21 = arith.constant 0 : index
    %c0_22 = arith.constant 0 : index
    %38 = vector.load %arg15[%c0_21, %c0_22] : memref<72x512xf32, #tpu.memory_space<vmem>>, vector<4x512xf32>
    tpu.vector_store %arg15[%c0_21, %c0_22], %37 {strides = array<i32>} : memref<72x512xf32, #tpu.memory_space<vmem>>, vector<4x512xf32>,
    %c0_23 = arith.constant 0 : index
    %c112 = arith.constant 112 : index
    %39 = vector.load %arg14[%c0_23, %c112] : memref<4x768xf32, #tpu.memory_space<vmem>>, vector<4x512xf32>
    %c1 = arith.constant 1 : index
    %c0_24 = arith.constant 0 : index
    %40 = vector.load %arg12[%c1, %c0_24] : memref<9x512xf32, #tpu.memory_space<vmem>>, vector<1x512xf32>
    %41 = vector.broadcast %40 : vector<1x512xf32> to vector<4x512xf32>
    %42 = arith.mulf %39, %41 : vector<4x512xf32>
    %c8 = arith.constant 8 : index
    %c0_25 = arith.constant 0 : index
    %43 = vector.load %arg15[%c8, %c0_25] : memref<72x512xf32, #tpu.memory_space<vmem>>, vector<4x512xf32>
    tpu.vector_store %arg15[%c8, %c0_25], %42 {strides = array<i32>} : memref<72x512xf32, #tpu.memory_space<vmem>>, vector<4x512xf32>,
    %c0_26 = arith.constant 0 : index
    %c113 = arith.constant 113 : index
    %44 = vector.load %arg14[%c0_26, %c113] : memref<4x768xf32, #tpu.memory_space<vmem>>, vector<4x512xf32>
    %c2 = arith.constant 2 : index
    %c0_27 = arith.constant 0 : index
    %45 = vector.load %arg12[%c2, %c0_27] : memref<9x512xf32, #tpu.memory_space<vmem>>, vector<1x512xf32>
    %46 = vector.broadcast %45 : vector<1x512xf32> to vector<4x512xf32>
    %47 = arith.mulf %44, %46 : vector<4x512xf32>
    %c16 = arith.constant 16 : index
    %c0_28 = arith.constant 0 : index
    %48 = vector.load %arg15[%c16, %c0_28] : memref<72x512xf32, #tpu.memory_space<vmem>>, vector<4x512xf32>
    tpu.vector_store %arg15[%c16, %c0_28], %47 {strides = array<i32>} : memref<72x512xf32, #tpu.memory_space<vmem>>, vector<4x512xf32>,
    %c0_29 = arith.constant 0 : index
    %c127 = arith.constant 127 : index
    %49 = vector.load %arg14[%c0_29, %c127] : memref<4x768xf32, #tpu.memory_space<vmem>>, vector<4x512xf32>
    %c3 = arith.constant 3 : index
    %c0_30 = arith.constant 0 : index
    %50 = vector.load %arg12[%c3, %c0_30] : memref<9x512xf32, #tpu.memory_space<vmem>>, vector<1x512xf32>
    %51 = vector.broadcast %50 : vector<1x512xf32> to vector<4x512xf32>
    %52 = arith.mulf %49, %51 : vector<4x512xf32>
    %c24 = arith.constant 24 : index
    %c0_31 = arith.constant 0 : index
    %53 = vector.load %arg15[%c24, %c0_31] : memref<72x512xf32, #tpu.memory_space<vmem>>, vector<4x512xf32>
    tpu.vector_store %arg15[%c24, %c0_31], %52 {strides = array<i32>} : memref<72x512xf32, #tpu.memory_space<vmem>>, vector<4x512xf32>,
    %c0_32 = arith.constant 0 : index
    %c128_33 = arith.constant 128 : index
    %54 = vector.load %arg14[%c0_32, %c128_33] : memref<4x768xf32, #tpu.memory_space<vmem>>, vector<4x512xf32>
    %c4 = arith.constant 4 : index
    %c0_34 = arith.constant 0 : index
    %55 = vector.load %arg12[%c4, %c0_34] : memref<9x512xf32, #tpu.memory_space<vmem>>, vector<1x512xf32>
    %56 = vector.broadcast %55 : vector<1x512xf32> to vector<4x512xf32>
    %57 = arith.mulf %54, %56 : vector<4x512xf32>
    %c32 = arith.constant 32 : index
    %c0_35 = arith.constant 0 : index
    %58 = vector.load %arg15[%c32, %c0_35] : memref<72x512xf32, #tpu.memory_space<vmem>>, vector<4x512xf32>
    tpu.vector_store %arg15[%c32, %c0_35], %57 {strides = array<i32>} : memref<72x512xf32, #tpu.memory_space<vmem>>, vector<4x512xf32>,
    %c0_36 = arith.constant 0 : index
    %c129 = arith.constant 129 : index
    %59 = vector.load %arg14[%c0_36, %c129] : memref<4x768xf32, #tpu.memory_space<vmem>>, vector<4x512xf32>
    %c5 = arith.constant 5 : index
    %c0_37 = arith.constant 0 : index
    %60 = vector.load %arg12[%c5, %c0_37] : memref<9x512xf32, #tpu.memory_space<vmem>>, vector<1x512xf32>
    %61 = vector.broadcast %60 : vector<1x512xf32> to vector<4x512xf32>
    %62 = arith.mulf %59, %61 : vector<4x512xf32>
    %c40 = arith.constant 40 : index
    %c0_38 = arith.constant 0 : index
    %63 = vector.load %arg15[%c40, %c0_38] : memref<72x512xf32, #tpu.memory_space<vmem>>, vector<4x512xf32>
    tpu.vector_store %arg15[%c40, %c0_38], %62 {strides = array<i32>} : memref<72x512xf32, #tpu.memory_space<vmem>>, vector<4x512xf32>,
    %c0_39 = arith.constant 0 : index
    %c143 = arith.constant 143 : index
    %64 = vector.load %arg14[%c0_39, %c143] : memref<4x768xf32, #tpu.memory_space<vmem>>, vector<4x512xf32>
    %c6 = arith.constant 6 : index
    %c0_40 = arith.constant 0 : index
    %65 = vector.load %arg12[%c6, %c0_40] : memref<9x512xf32, #tpu.memory_space<vmem>>, vector<1x512xf32>
    %66 = vector.broadcast %65 : vector<1x512xf32> to vector<4x512xf32>
    %67 = arith.mulf %64, %66 : vector<4x512xf32>
    %c48 = arith.constant 48 : index
    %c0_41 = arith.constant 0 : index
    %68 = vector.load %arg15[%c48, %c0_41] : memref<72x512xf32, #tpu.memory_space<vmem>>, vector<4x512xf32>
    tpu.vector_store %arg15[%c48, %c0_41], %67 {strides = array<i32>} : memref<72x512xf32, #tpu.memory_space<vmem>>, vector<4x512xf32>,
    %c0_42 = arith.constant 0 : index
    %c144 = arith.constant 144 : index
    %69 = vector.load %arg14[%c0_42, %c144] : memref<4x768xf32, #tpu.memory_space<vmem>>, vector<4x512xf32>
    %c7 = arith.constant 7 : index
    %c0_43 = arith.constant 0 : index
    %70 = vector.load %arg12[%c7, %c0_43] : memref<9x512xf32, #tpu.memory_space<vmem>>, vector<1x512xf32>
    %71 = vector.broadcast %70 : vector<1x512xf32> to vector<4x512xf32>
    %72 = arith.mulf %69, %71 : vector<4x512xf32>
    %c56 = arith.constant 56 : index
    %c0_44 = arith.constant 0 : index
    %73 = vector.load %arg15[%c56, %c0_44] : memref<72x512xf32, #tpu.memory_space<vmem>>, vector<4x512xf32>
    tpu.vector_store %arg15[%c56, %c0_44], %72 {strides = array<i32>} : memref<72x512xf32, #tpu.memory_space<vmem>>, vector<4x512xf32>,
    %c0_45 = arith.constant 0 : index
    %c145 = arith.constant 145 : index
    %74 = vector.load %arg14[%c0_45, %c145] : memref<4x768xf32, #tpu.memory_space<vmem>>, vector<4x512xf32>
    %c8_46 = arith.constant 8 : index
    %c0_47 = arith.constant 0 : index
    %75 = vector.load %arg12[%c8_46, %c0_47] : memref<9x512xf32, #tpu.memory_space<vmem>>, vector<1x512xf32>
    %76 = vector.broadcast %75 : vector<1x512xf32> to vector<4x512xf32>
    %77 = arith.mulf %74, %76 : vector<4x512xf32>
    %c64 = arith.constant 64 : index
    %c0_48 = arith.constant 0 : index
    %78 = vector.load %arg15[%c64, %c0_48] : memref<72x512xf32, #tpu.memory_space<vmem>>, vector<4x512xf32>
    tpu.vector_store %arg15[%c64, %c0_48], %77 {strides = array<i32>} : memref<72x512xf32, #tpu.memory_space<vmem>>, vector<4x512xf32>,
    %c0_49 = arith.constant 0 : index
    %c0_50 = arith.constant 0 : index
    %79 = vector.load %arg2[%c0_49, %c0_50] : memref<4x72xf32, #tpu.memory_space<vmem>>, vector<4x72xf32>
    %c0_51 = arith.constant 0 : index
    %c0_52 = arith.constant 0 : index
    %80 = vector.load %arg15[%c0_51, %c0_52] : memref<72x512xf32, #tpu.memory_space<vmem>>, vector<72x512xf32>
    %cst_53 = arith.constant dense<0.000000e+00> : vector<4x512xf32>
    %81 = tpu.matmul %79, %80, %cst_53 {dimension_numbers = #tpu.dot_dimension_numbers<[1], [0], [0], [1], [0, 0, 1, 1], [], []>} : vector<4x72xf32>, vector<72x512xf32>, vector<4x512xf32> -> vector<4x512xf32>
    %c0_54 = arith.constant 0 : index
    %c0_55 = arith.constant 0 : index
    %82 = vector.load %arg3[%c0_54, %c0_55] : memref<4x1xf32, #tpu.memory_space<vmem>>, vector<4x1xf32>
    %83 = vector.broadcast %82 : vector<4x1xf32> to vector<4x512xf32>
    %84 = arith.addf %81, %83 : vector<4x512xf32>
    %cst_56 = arith.constant dense<0.000000e+00> : vector<4xf32>
    %85 = vector.multi_reduction <add>, %84, %cst_56 [1] : vector<4x512xf32> to vector<4xf32>
    %86 = vector.shape_cast %85 : vector<4xf32> to vector<4x1xf32>
    %87 = arith.mulf %84, %84 : vector<4x512xf32>
    %cst_57 = arith.constant dense<0.000000e+00> : vector<4xf32>
    %88 = vector.multi_reduction <add>, %87, %cst_57 [1] : vector<4x512xf32> to vector<4xf32>
    %89 = vector.shape_cast %88 : vector<4xf32> to vector<4x1xf32>
    %cst_58 = arith.constant 0.001953125 : f32
    %90 = vector.broadcast %cst_58 : f32 to vector<4x1xf32>
    %91 = arith.mulf %86, %90 : vector<4x1xf32>
    %cst_59 = arith.constant 0.001953125 : f32
    %92 = vector.broadcast %cst_59 : f32 to vector<4x1xf32>
    %93 = arith.mulf %89, %92 : vector<4x1xf32>
    %94 = arith.mulf %91, %91 : vector<4x1xf32>
    %95 = arith.subf %93, %94 : vector<4x1xf32>
    %cst_60 = arith.constant 0.000000e+00 : f32
    %96 = vector.broadcast %cst_60 : f32 to vector<4x1xf32>
    %97 = arith.maximumf %95, %96 : vector<4x1xf32>
    %98 = vector.broadcast %91 : vector<4x1xf32> to vector<4x512xf32>
    %99 = arith.subf %84, %98 : vector<4x512xf32>
    %cst_61 = arith.constant 9.99999974E-6 : f32
    %100 = vector.broadcast %cst_61 : f32 to vector<4x1xf32>
    %101 = arith.addf %97, %100 : vector<4x1xf32>
    %102 = math.rsqrt %101 : vector<4x1xf32>
    %103 = vector.broadcast %102 : vector<4x1xf32> to vector<4x512xf32>
    %104 = arith.mulf %99, %103 : vector<4x512xf32>
    %c0_62 = arith.constant 0 : index
    %c0_63 = arith.constant 0 : index
    %105 = vector.load %arg10[%c0_62, %c0_63] : memref<4x1xf32, #tpu.memory_space<vmem>>, vector<4x1xf32>
    %106 = vector.broadcast %105 : vector<4x1xf32> to vector<4x512xf32>
    %107 = arith.mulf %104, %106 : vector<4x512xf32>
    %c0_64 = arith.constant 0 : index
    %c0_65 = arith.constant 0 : index
    %108 = vector.load %arg11[%c0_64, %c0_65] : memref<4x1xf32, #tpu.memory_space<vmem>>, vector<4x1xf32>
    %109 = vector.broadcast %108 : vector<4x1xf32> to vector<4x512xf32>
    %110 = arith.addf %107, %109 : vector<4x512xf32>
    %cst_66 = arith.constant 0.000000e+00 : f32
    %111 = vector.broadcast %cst_66 : f32 to vector<4x512xf32>
    %112 = arith.maximumf %110, %111 : vector<4x512xf32>
    %c0_67 = arith.constant 0 : index
    %c128_68 = arith.constant 128 : index
    %113 = vector.load %arg14[%c0_67, %c128_68] : memref<4x768xf32, #tpu.memory_space<vmem>>, vector<4x512xf32>
    tpu.vector_store %arg14[%c0_67, %c128_68], %112 {strides = array<i32>} : memref<4x768xf32, #tpu.memory_space<vmem>>, vector<4x512xf32>,
    %c0_69 = arith.constant 0 : index
    %c111_70 = arith.constant 111 : index
    %114 = vector.load %arg14[%c0_69, %c111_70] : memref<4x768xf32, #tpu.memory_space<vmem>>, vector<4x512xf32>
    %c0_71 = arith.constant 0 : index
    %c0_72 = arith.constant 0 : index
    %115 = vector.load %arg12[%c0_71, %c0_72] : memref<9x512xf32, #tpu.memory_space<vmem>>, vector<1x512xf32>
    %116 = vector.broadcast %115 : vector<1x512xf32> to vector<4x512xf32>
    %117 = arith.mulf %114, %116 : vector<4x512xf32>
    %c0_73 = arith.constant 0 : index
    %c0_74 = arith.constant 0 : index
    %118 = vector.load %arg15[%c0_73, %c0_74] : memref<72x512xf32, #tpu.memory_space<vmem>>, vector<4x512xf32>
    tpu.vector_store %arg15[%c0_73, %c0_74], %117 {strides = array<i32>} : memref<72x512xf32, #tpu.memory_space<vmem>>, vector<4x512xf32>,
    %c0_75 = arith.constant 0 : index
    %c112_76 = arith.constant 112 : index
    %119 = vector.load %arg14[%c0_75, %c112_76] : memref<4x768xf32, #tpu.memory_space<vmem>>, vector<4x512xf32>
    %c1_77 = arith.constant 1 : index
    %c0_78 = arith.constant 0 : index
    %120 = vector.load %arg12[%c1_77, %c0_78] : memref<9x512xf32, #tpu.memory_space<vmem>>, vector<1x512xf32>
    %121 = vector.broadcast %120 : vector<1x512xf32> to vector<4x512xf32>
    %122 = arith.mulf %119, %121 : vector<4x512xf32>
    %c8_79 = arith.constant 8 : index
    %c0_80 = arith.constant 0 : index
    %123 = vector.load %arg15[%c8_79, %c0_80] : memref<72x512xf32, #tpu.memory_space<vmem>>, vector<4x512xf32>
    tpu.vector_store %arg15[%c8_79, %c0_80], %122 {strides = array<i32>} : memref<72x512xf32, #tpu.memory_space<vmem>>, vector<4x512xf32>,
    %c0_81 = arith.constant 0 : index
    %c113_82 = arith.constant 113 : index
    %124 = vector.load %arg14[%c0_81, %c113_82] : memref<4x768xf32, #tpu.memory_space<vmem>>, vector<4x512xf32>
    %c2_83 = arith.constant 2 : index
    %c0_84 = arith.constant 0 : index
    %125 = vector.load %arg12[%c2_83, %c0_84] : memref<9x512xf32, #tpu.memory_space<vmem>>, vector<1x512xf32>
    %126 = vector.broadcast %125 : vector<1x512xf32> to vector<4x512xf32>
    %127 = arith.mulf %124, %126 : vector<4x512xf32>
    %c16_85 = arith.constant 16 : index
    %c0_86 = arith.constant 0 : index
    %128 = vector.load %arg15[%c16_85, %c0_86] : memref<72x512xf32, #tpu.memory_space<vmem>>, vector<4x512xf32>
    tpu.vector_store %arg15[%c16_85, %c0_86], %127 {strides = array<i32>} : memref<72x512xf32, #tpu.memory_space<vmem>>, vector<4x512xf32>,
    %c0_87 = arith.constant 0 : index
    %c127_88 = arith.constant 127 : index
    %129 = vector.load %arg14[%c0_87, %c127_88] : memref<4x768xf32, #tpu.memory_space<vmem>>, vector<4x512xf32>
    %c3_89 = arith.constant 3 : index
    %c0_90 = arith.constant 0 : index
    %130 = vector.load %arg12[%c3_89, %c0_90] : memref<9x512xf32, #tpu.memory_space<vmem>>, vector<1x512xf32>
    %131 = vector.broadcast %130 : vector<1x512xf32> to vector<4x512xf32>
    %132 = arith.mulf %129, %131 : vector<4x512xf32>
    %c24_91 = arith.constant 24 : index
    %c0_92 = arith.constant 0 : index
    %133 = vector.load %arg15[%c24_91, %c0_92] : memref<72x512xf32, #tpu.memory_space<vmem>>, vector<4x512xf32>
    tpu.vector_store %arg15[%c24_91, %c0_92], %132 {strides = array<i32>} : memref<72x512xf32, #tpu.memory_space<vmem>>, vector<4x512xf32>,
    %c0_93 = arith.constant 0 : index
    %c128_94 = arith.constant 128 : index
    %134 = vector.load %arg14[%c0_93, %c128_94] : memref<4x768xf32, #tpu.memory_space<vmem>>, vector<4x512xf32>
    %c4_95 = arith.constant 4 : index
    %c0_96 = arith.constant 0 : index
    %135 = vector.load %arg12[%c4_95, %c0_96] : memref<9x512xf32, #tpu.memory_space<vmem>>, vector<1x512xf32>
    %136 = vector.broadcast %135 : vector<1x512xf32> to vector<4x512xf32>
    %137 = arith.mulf %134, %136 : vector<4x512xf32>
    %c32_97 = arith.constant 32 : index
    %c0_98 = arith.constant 0 : index
    %138 = vector.load %arg15[%c32_97, %c0_98] : memref<72x512xf32, #tpu.memory_space<vmem>>, vector<4x512xf32>
    tpu.vector_store %arg15[%c32_97, %c0_98], %137 {strides = array<i32>} : memref<72x512xf32, #tpu.memory_space<vmem>>, vector<4x512xf32>,
    %c0_99 = arith.constant 0 : index
    %c129_100 = arith.constant 129 : index
    %139 = vector.load %arg14[%c0_99, %c129_100] : memref<4x768xf32, #tpu.memory_space<vmem>>, vector<4x512xf32>
    %c5_101 = arith.constant 5 : index
    %c0_102 = arith.constant 0 : index
    %140 = vector.load %arg12[%c5_101, %c0_102] : memref<9x512xf32, #tpu.memory_space<vmem>>, vector<1x512xf32>
    %141 = vector.broadcast %140 : vector<1x512xf32> to vector<4x512xf32>
    %142 = arith.mulf %139, %141 : vector<4x512xf32>
    %c40_103 = arith.constant 40 : index
    %c0_104 = arith.constant 0 : index
    %143 = vector.load %arg15[%c40_103, %c0_104] : memref<72x512xf32, #tpu.memory_space<vmem>>, vector<4x512xf32>
    tpu.vector_store %arg15[%c40_103, %c0_104], %142 {strides = array<i32>} : memref<72x512xf32, #tpu.memory_space<vmem>>, vector<4x512xf32>,
    %c0_105 = arith.constant 0 : index
    %c143_106 = arith.constant 143 : index
    %144 = vector.load %arg14[%c0_105, %c143_106] : memref<4x768xf32, #tpu.memory_space<vmem>>, vector<4x512xf32>
    %c6_107 = arith.constant 6 : index
    %c0_108 = arith.constant 0 : index
    %145 = vector.load %arg12[%c6_107, %c0_108] : memref<9x512xf32, #tpu.memory_space<vmem>>, vector<1x512xf32>
    %146 = vector.broadcast %145 : vector<1x512xf32> to vector<4x512xf32>
    %147 = arith.mulf %144, %146 : vector<4x512xf32>
    %c48_109 = arith.constant 48 : index
    %c0_110 = arith.constant 0 : index
    %148 = vector.load %arg15[%c48_109, %c0_110] : memref<72x512xf32, #tpu.memory_space<vmem>>, vector<4x512xf32>
    tpu.vector_store %arg15[%c48_109, %c0_110], %147 {strides = array<i32>} : memref<72x512xf32, #tpu.memory_space<vmem>>, vector<4x512xf32>,
    %c0_111 = arith.constant 0 : index
    %c144_112 = arith.constant 144 : index
    %149 = vector.load %arg14[%c0_111, %c144_112] : memref<4x768xf32, #tpu.memory_space<vmem>>, vector<4x512xf32>
    %c7_113 = arith.constant 7 : index
    %c0_114 = arith.constant 0 : index
    %150 = vector.load %arg12[%c7_113, %c0_114] : memref<9x512xf32, #tpu.memory_space<vmem>>, vector<1x512xf32>
    %151 = vector.broadcast %150 : vector<1x512xf32> to vector<4x512xf32>
    %152 = arith.mulf %149, %151 : vector<4x512xf32>
    %c56_115 = arith.constant 56 : index
    %c0_116 = arith.constant 0 : index
    %153 = vector.load %arg15[%c56_115, %c0_116] : memref<72x512xf32, #tpu.memory_space<vmem>>, vector<4x512xf32>
    tpu.vector_store %arg15[%c56_115, %c0_116], %152 {strides = array<i32>} : memref<72x512xf32, #tpu.memory_space<vmem>>, vector<4x512xf32>,
    %c0_117 = arith.constant 0 : index
    %c145_118 = arith.constant 145 : index
    %154 = vector.load %arg14[%c0_117, %c145_118] : memref<4x768xf32, #tpu.memory_space<vmem>>, vector<4x512xf32>
    %c8_119 = arith.constant 8 : index
    %c0_120 = arith.constant 0 : index
    %155 = vector.load %arg12[%c8_119, %c0_120] : memref<9x512xf32, #tpu.memory_space<vmem>>, vector<1x512xf32>
    %156 = vector.broadcast %155 : vector<1x512xf32> to vector<4x512xf32>
    %157 = arith.mulf %154, %156 : vector<4x512xf32>
    %c64_121 = arith.constant 64 : index
    %c0_122 = arith.constant 0 : index
    %158 = vector.load %arg15[%c64_121, %c0_122] : memref<72x512xf32, #tpu.memory_space<vmem>>, vector<4x512xf32>
    tpu.vector_store %arg15[%c64_121, %c0_122], %157 {strides = array<i32>} : memref<72x512xf32, #tpu.memory_space<vmem>>, vector<4x512xf32>,
    %c0_123 = arith.constant 0 : index
    %c0_124 = arith.constant 0 : index
    %159 = vector.load %arg4[%c0_123, %c0_124] : memref<8x72xf32, #tpu.memory_space<vmem>>, vector<8x72xf32>
    %c0_125 = arith.constant 0 : index
    %c0_126 = arith.constant 0 : index
    %160 = vector.load %arg15[%c0_125, %c0_126] : memref<72x512xf32, #tpu.memory_space<vmem>>, vector<72x512xf32>
    %cst_127 = arith.constant dense<0.000000e+00> : vector<8x512xf32>
    %161 = tpu.matmul %159, %160, %cst_127 {dimension_numbers = #tpu.dot_dimension_numbers<[1], [0], [0], [1], [0, 0, 1, 1], [], []>} : vector<8x72xf32>, vector<72x512xf32>, vector<8x512xf32> -> vector<8x512xf32>
    %c0_128 = arith.constant 0 : index
    %c0_129 = arith.constant 0 : index
    %162 = vector.load %arg5[%c0_128, %c0_129] : memref<8x1xf32, #tpu.memory_space<vmem>>, vector<8x1xf32>
    %163 = vector.broadcast %162 : vector<8x1xf32> to vector<8x512xf32>
    %164 = arith.addf %161, %163 : vector<8x512xf32>
    %c0_130 = arith.constant 0 : index
    %c0_131 = arith.constant 0 : index
    %165 = vector.load %arg6[%c0_130, %c0_131] : memref<8x4xf32, #tpu.memory_space<vmem>>, vector<8x4xf32>
    %cst_132 = arith.constant dense<0.000000e+00> : vector<8x512xf32>
    %166 = tpu.matmul %165, %4, %cst_132 {dimension_numbers = #tpu.dot_dimension_numbers<[1], [0], [0], [1], [0, 0, 1, 1], [], []>} : vector<8x4xf32>, vector<4x512xf32>, vector<8x512xf32> -> vector<8x512xf32>
    %c0_133 = arith.constant 0 : index
    %c0_134 = arith.constant 0 : index
    %167 = vector.load %arg7[%c0_133, %c0_134] : memref<8x1xf32, #tpu.memory_space<vmem>>, vector<8x1xf32>
    %168 = vector.broadcast %167 : vector<8x1xf32> to vector<8x512xf32>
    %169 = arith.addf %166, %168 : vector<8x512xf32>
    %170 = arith.addf %164, %169 : vector<8x512xf32>
    %c0_135 = arith.constant 0 : index
    %c0_136 = arith.constant 0 : index
    %171 = vector.load %arg13[%c0_135, %c0_136] : memref<8x512xf32, #tpu.memory_space<vmem>>, vector<8x512xf32>
    tpu.vector_store %arg13[%c0_135, %c0_136], %170 {strides = array<i32>} : memref<8x512xf32, #tpu.memory_space<vmem>>, vector<8x512xf32>,
    return
  }
  func.func @transform_0(%arg0: i32) -> (i32, i32) {
    %c0_i32 = arith.constant 0 : i32
    %c0_i32_0 = arith.constant 0 : i32
    %c0_i32_1 = arith.constant 0 : i32
    return %c0_i32, %c0_i32_0 : i32, i32
  }
  func.func @transform_1(%arg0: i32) -> (i32, i32) {
    %c0_i32 = arith.constant 0 : i32
    %c0_i32_0 = arith.constant 0 : i32
    %c0_i32_1 = arith.constant 0 : i32
    return %c0_i32, %c0_i32_0 : i32, i32
  }
  func.func @transform_2(%arg0: i32) -> (i32, i32) {
    %c0_i32 = arith.constant 0 : i32
    %c0_i32_0 = arith.constant 0 : i32
    %c0_i32_1 = arith.constant 0 : i32
    return %c0_i32, %c0_i32_0 : i32, i32
  }
  func.func @transform_3(%arg0: i32) -> (i32, i32) {
    %c0_i32 = arith.constant 0 : i32
    %c0_i32_0 = arith.constant 0 : i32
    %c0_i32_1 = arith.constant 0 : i32
    return %c0_i32, %c0_i32_0 : i32, i32
  }
  func.func @transform_4(%arg0: i32) -> (i32, i32) {
    %c0_i32 = arith.constant 0 : i32
    %c0_i32_0 = arith.constant 0 : i32
    %c0_i32_1 = arith.constant 0 : i32
    return %c0_i32, %c0_i32_0 : i32, i32
  }
  func.func @transform_5(%arg0: i32) -> (i32, i32) {
    %c0_i32 = arith.constant 0 : i32
    %c0_i32_0 = arith.constant 0 : i32
    %c0_i32_1 = arith.constant 0 : i32
    return %c0_i32, %c0_i32_0 : i32, i32
  }
  func.func @transform_6(%arg0: i32) -> (i32, i32) {
    %c0_i32 = arith.constant 0 : i32
    %c0_i32_0 = arith.constant 0 : i32
    %c0_i32_1 = arith.constant 0 : i32
    return %c0_i32, %c0_i32_0 : i32, i32
  }
  func.func @transform_7(%arg0: i32) -> (i32, i32) {
    %c0_i32 = arith.constant 0 : i32
    %c0_i32_0 = arith.constant 0 : i32
    %c0_i32_1 = arith.constant 0 : i32
    return %c0_i32, %c0_i32_0 : i32, i32
  }
  func.func @transform_8(%arg0: i32) -> (i32, i32) {
    %c0_i32 = arith.constant 0 : i32
    %c0_i32_0 = arith.constant 0 : i32
    %c0_i32_1 = arith.constant 0 : i32
    return %c0_i32, %c0_i32_0 : i32, i32
  }
  func.func @transform_9(%arg0: i32) -> (i32, i32) {
    %c0_i32 = arith.constant 0 : i32
    %c0_i32_0 = arith.constant 0 : i32
    %c0_i32_1 = arith.constant 0 : i32
    return %c0_i32, %c0_i32_0 : i32, i32
  }
  func.func @transform_10(%arg0: i32) -> (i32, i32) {
    %c0_i32 = arith.constant 0 : i32
    %c0_i32_0 = arith.constant 0 : i32
    %c0_i32_1 = arith.constant 0 : i32
    return %c0_i32, %c0_i32_0 : i32, i32
  }
  func.func @transform_11(%arg0: i32) -> (i32, i32) {
    %c0_i32 = arith.constant 0 : i32
    %c0_i32_0 = arith.constant 0 : i32
    %c0_i32_1 = arith.constant 0 : i32
    return %c0_i32, %c0_i32_0 : i32, i32
  }
  func.func @transform_12(%arg0: i32) -> (i32, i32) {
    %c0_i32 = arith.constant 0 : i32
    %c0_i32_0 = arith.constant 0 : i32
    %c0_i32_1 = arith.constant 0 : i32
    return %c0_i32, %c0_i32_0 : i32, i32
  }
}

</mosaic_0001>

<llo_original>
// kernel: tpu_custom_call.1
$region0: #{tpu_custom_call.1}
  #allocation0 [shape = 'u32[]', space=smem, size = 0x4, offset = 0x4, fixed_abs, tag = 'smem constant byte address 0x4 - core index']
  #allocation1 [shape = 'u32[72,128]{1,0:T(1,128)}', space=vmem, size = 0x9000, scoped, tag = 'internal scratch']
  #allocation2 [shape = 'f32[4,768]{1,0:T(4,128)}', space=vmem, size = 0x3000, scoped, tag = 'scratch operand']
  #allocation3 [shape = 'f32[72,512]{1,0:T(8,128)}', space=vmem, size = 0x24000, scoped, tag = 'scratch operand']
  %s0 = inlined_call_operand.hbm [shape: f32[4,512], index: 0, kind: input, shape index: {}]
  %s1 = inlined_call_operand.hbm [shape: f32[4,72], index: 1, kind: input, shape index: {}]
  %s2 = inlined_call_operand.vmem [shape: f32[4,1], index: 2, kind: input, shape index: {}]
  %s3 = inlined_call_operand.hbm [shape: f32[8,72], index: 3, kind: input, shape index: {}]
  %s4 = inlined_call_operand.vmem [shape: f32[8,1], index: 4, kind: input, shape index: {}]
  %s5 = inlined_call_operand.vmem [shape: f32[8,4], index: 5, kind: input, shape index: {}]
  %s6 = inlined_call_operand.vmem [shape: f32[8,1], index: 6, kind: input, shape index: {}]
  %s7 = inlined_call_operand.vmem [shape: f32[4,1], index: 7, kind: input, shape index: {}]
  %s8 = inlined_call_operand.vmem [shape: f32[4,1], index: 8, kind: input, shape index: {}]
  %s9 = inlined_call_operand.vmem [shape: f32[4,1], index: 9, kind: input, shape index: {}]
  %s10 = inlined_call_operand.vmem [shape: f32[4,1], index: 10, kind: input, shape index: {}]
  %s11 = inlined_call_operand.vmem [shape: f32[9,512], index: 11, kind: input, shape index: {}]
  %s12 = inlined_call_operand.hbm [shape: f32[8,512], index: 12, kind: output, shape index: {}]
  %s13 = sld [smem:[#allocation0]]
  $region70: #{tpu_custom_call.1} parent=0
    _
  %s15 = ssub.s32 1, %s13
  %s16 = scalar_select 0, %s15, %s13
  $region1: #{tpu_custom_call.1} parent=0
    #allocation4 [shape = 'u8[8192]{0}', space=vmem, size = 0x2000, scoped, tag = 'input window, operand 0, single buffered']
    #allocation5 [shape = 's32[1]{0}', space=sflag, size = 0x4, scoped, tag = 'scoped memory for tpu_custom_call.1']
    #allocation6 [shape = 's32[1]{0}', space=sflag, size = 0x4, scoped, tag = 'scoped memory for tpu_custom_call.1']
    #allocation7 [shape = 'u8[2048]{0}', space=vmem, size = 0x800, scoped, tag = 'input window, operand 1, single buffered']
    #allocation8 [shape = 's32[1]{0}', space=sflag, size = 0x4, scoped, tag = 'scoped memory for tpu_custom_call.1']
    #allocation9 [shape = 'u8[4096]{0}', space=vmem, size = 0x1000, scoped, tag = 'input window, operand 3, single buffered']
    #allocation10 [shape = 'u8[16384]{0}', space=vmem, size = 0x4000, scoped, tag = 'output window, operand 0, single buffered']
    %17 = vsyncpa [#allocation5], 0
    %18 = vsyncpa [#allocation8], 0
    %19 = vsyncpa [#allocation6], 0
    // Predicated region
    $region2: #{tpu_custom_call.1} parent=1 // pred_check
      _
    $region3: #{tpu_custom_call.1} parent=1 // pred_check_branch
      %21 = sbr.rel (0) target = $region5
    $region4: #{tpu_custom_call.1} parent=1 // pred_region
      %23 = vsyncadd [#allocation5], 0
      %s25 = sshll.u32 %s0, 4
      %s26 = int_to_ptr.hbm [resolvable:$true] %s25
      %s27 = sshll.u32 [#allocation4], 4
      %s28 = int_to_ptr.vmem [resolvable:$true] %s27
      %30 = dma.hbm_to_vmem [thread:$0]  %s26, 256, %s28, [#allocation5]
    $region5: #{tpu_custom_call.1} parent=1 // pred_fallthru
      _
    // Predicated region
    $region6: #{tpu_custom_call.1} parent=1 // pred_check
      _
    $region7: #{tpu_custom_call.1} parent=1 // pred_check_branch
      %32 = sbr.rel (0) target = $region9
    $region8: #{tpu_custom_call.1} parent=1 // pred_region
      %34 = vsyncadd [#allocation8], 0
      %s36 = sshll.u32 %s1, 4
      %s37 = int_to_ptr.hbm [resolvable:$true] %s36
      %s38 = sshll.u32 [#allocation7], 4
      %s39 = int_to_ptr.vmem [resolvable:$true] %s38
      %41 = dma.hbm_to_vmem [thread:$0]  %s37, 64, %s39, [#allocation8]
    $region9: #{tpu_custom_call.1} parent=1 // pred_fallthru
      _
    // Predicated region
    $region10: #{tpu_custom_call.1} parent=1 // pred_check
      _
    $region11: #{tpu_custom_call.1} parent=1 // pred_check_branch
      %43 = sbr.rel (0) target = $region13
    $region12: #{tpu_custom_call.1} parent=1 // pred_region
      _
    $region13: #{tpu_custom_call.1} parent=1 // pred_fallthru
      _
    // Predicated region
    $region14: #{tpu_custom_call.1} parent=1 // pred_check
      _
    $region15: #{tpu_custom_call.1} parent=1 // pred_check_branch
      %45 = sbr.rel (0) target = $region17
    $region16: #{tpu_custom_call.1} parent=1 // pred_region
      %47 = vsyncadd [#allocation8], 0
      %s49 = sshll.u32 %s3, 4
      %s50 = int_to_ptr.hbm [resolvable:$true] %s49
      %s51 = sshll.u32 [#allocation9], 4
      %s52 = int_to_ptr.vmem [resolvable:$true] %s51
      %54 = dma.hbm_to_vmem [thread:$0]  %s50, 128, %s52, [#allocation8]
    $region17: #{tpu_custom_call.1} parent=1 // pred_fallthru
      _
    // Predicated region
    $region18: #{tpu_custom_call.1} parent=1 // pred_check
      _
    $region19: #{tpu_custom_call.1} parent=1 // pred_check_branch
      %56 = sbr.rel (0) target = $region21
    $region20: #{tpu_custom_call.1} parent=1 // pred_region
      _
    $region21: #{tpu_custom_call.1} parent=1 // pred_fallthru
      _
    // Predicated region
    $region22: #{tpu_custom_call.1} parent=1 // pred_check
      _
    $region23: #{tpu_custom_call.1} parent=1 // pred_check_branch
      %58 = sbr.rel (0) target = $region25
    $region24: #{tpu_custom_call.1} parent=1 // pred_region
      _
    $region25: #{tpu_custom_call.1} parent=1 // pred_fallthru
      _
    // Predicated region
    $region26: #{tpu_custom_call.1} parent=1 // pred_check
      _
    $region27: #{tpu_custom_call.1} parent=1 // pred_check_branch
      %60 = sbr.rel (0) target = $region29
    $region28: #{tpu_custom_call.1} parent=1 // pred_region
      _
    $region29: #{tpu_custom_call.1} parent=1 // pred_fallthru
      _
    // Predicated region
    $region30: #{tpu_custom_call.1} parent=1 // pred_check
      _
    $region31: #{tpu_custom_call.1} parent=1 // pred_check_branch
      %62 = sbr.rel (0) target = $region33
    $region32: #{tpu_custom_call.1} parent=1 // pred_region
      _
    $region33: #{tpu_custom_call.1} parent=1 // pred_fallthru
      _
    // Predicated region
    $region34: #{tpu_custom_call.1} parent=1 // pred_check
      _
    $region35: #{tpu_custom_call.1} parent=1 // pred_check_branch
      %64 = sbr.rel (0) target = $region37
    $region36: #{tpu_custom_call.1} parent=1 // pred_region
      _
    $region37: #{tpu_custom_call.1} parent=1 // pred_fallthru
      _
    // Predicated region
    $region38: #{tpu_custom_call.1} parent=1 // pred_check
      _
    $region39: #{tpu_custom_call.1} parent=1 // pred_check_branch
      %66 = sbr.rel (0) target = $region41
    $region40: #{tpu_custom_call.1} parent=1 // pred_region
      _
    $region41: #{tpu_custom_call.1} parent=1 // pred_fallthru
      _
    // Predicated region
    $region42: #{tpu_custom_call.1} parent=1 // pred_check
      _
    $region43: #{tpu_custom_call.1} parent=1 // pred_check_branch
      %68 = sbr.rel (0) target = $region45
    $region44: #{tpu_custom_call.1} parent=1 // pred_region
      _
    $region45: #{tpu_custom_call.1} parent=1 // pred_fallthru
      _
    // Predicated region
    $region46: #{tpu_custom_call.1} parent=1 // pred_check
      _
    $region47: #{tpu_custom_call.1} parent=1 // pred_check_branch
      %70 = sbr.rel (0) target = $region49
    $region48: #{tpu_custom_call.1} parent=1 // pred_region
      _
    $region49: #{tpu_custom_call.1} parent=1 // pred_fallthru
      _
    // Predicated region
    $region50: #{tpu_custom_call.1} parent=1 // pred_check
      _
    $region51: #{tpu_custom_call.1} parent=1 // pred_check_branch
      %72 = sbr.rel (0) target = $region53
    $region52: #{tpu_custom_call.1} parent=1 // pred_region
      %74 = dma.done [#allocation5], 256
    $region53: #{tpu_custom_call.1} parent=1 // pred_fallthru
      _
    // Predicated region
    $region54: #{tpu_custom_call.1} parent=1 // pred_check
      _
    $region55: #{tpu_custom_call.1} parent=1 // pred_check_branch
      %76 = sbr.rel (0) target = $region57
    $region56: #{tpu_custom_call.1} parent=1 // pred_region
      %78 = dma.done [#allocation8], 64
    $region57: #{tpu_custom_call.1} parent=1 // pred_fallthru
      _
    // Predicated region
    $region58: #{tpu_custom_call.1} parent=1 // pred_check
      _
    $region59: #{tpu_custom_call.1} parent=1 // pred_check_branch
      %80 = sbr.rel (0) target = $region61
    $region60: #{tpu_custom_call.1} parent=1 // pred_region
      %82 = dma.done [#allocation8], 128
    $region61: #{tpu_custom_call.1} parent=1 // pred_fallthru
      _
    %83 = vst [vmem:[#allocation2] sm:$0xff] 0.0
    %84 = vst [vmem:[#allocation2 + $0x8] sm:$0xff] 0.0
    %85 = vst [vmem:[#allocation2 + $0x10] sm:$0xff] 0.0
    %86 = vst [vmem:[#allocation3] sm:$0xff] 0.0
    %87 = vst [vmem:[#allocation3 + $0x8] sm:$0xff] 0.0
    %88 = vst [vmem:[#allocation3 + $0x10] sm:$0xff] 0.0
    %89 = vst [vmem:[#allocation3 + $0x18] sm:$0xff] 0.0
    %90 = vst [vmem:[#allocation3 + $0x20] sm:$0xff] 0.0
    %91 = vst [vmem:[#allocation3 + $0x28] sm:$0xff] 0.0
    %92 = vst [vmem:[#allocation3 + $0x30] sm:$0xff] 0.0
    %93 = vst [vmem:[#allocation3 + $0x38] sm:$0xff] 0.0
    %94 = vst [vmem:[#allocation3 + $0x40] sm:$0xff] 0.0
    %95 = vst [vmem:[#allocation3 + $0x48] sm:$0xff] 0.0
    %96 = vst [vmem:[#allocation3 + $0x50] sm:$0xff] 0.0
    %97 = vst [vmem:[#allocation3 + $0x58] sm:$0xff] 0.0
    %98 = vst [vmem:[#allocation3 + $0x60] sm:$0xff] 0.0
    %99 = vst [vmem:[#allocation3 + $0x68] sm:$0xff] 0.0
    %100 = vst [vmem:[#allocation3 + $0x70] sm:$0xff] 0.0
    %101 = vst [vmem:[#allocation3 + $0x78] sm:$0xff] 0.0
    %102 = vst [vmem:[#allocation3 + $0x80] sm:$0xff] 0.0
    %103 = vst [vmem:[#allocation3 + $0x88] sm:$0xff] 0.0
    %104 = vst [vmem:[#allocation3 + $0x90] sm:$0xff] 0.0
    %105 = vst [vmem:[#allocation3 + $0x98] sm:$0xff] 0.0
    %106 = vst [vmem:[#allocation3 + $0xa0] sm:$0xff] 0.0
    %107 = vst [vmem:[#allocation3 + $0xa8] sm:$0xff] 0.0
    %108 = vst [vmem:[#allocation3 + $0xb0] sm:$0xff] 0.0
    %109 = vst [vmem:[#allocation3 + $0xb8] sm:$0xff] 0.0
    %110 = vst [vmem:[#allocation3 + $0xc0] sm:$0xff] 0.0
    %111 = vst [vmem:[#allocation3 + $0xc8] sm:$0xff] 0.0
    %112 = vst [vmem:[#allocation3 + $0xd0] sm:$0xff] 0.0
    %113 = vst [vmem:[#allocation3 + $0xd8] sm:$0xff] 0.0
    %114 = vst [vmem:[#allocation3 + $0xe0] sm:$0xff] 0.0
    %115 = vst [vmem:[#allocation3 + $0xe8] sm:$0xff] 0.0
    %116 = vst [vmem:[#allocation3 + $0xf0] sm:$0xff] 0.0
    %117 = vst [vmem:[#allocation3 + $0xf8] sm:$0xff] 0.0
    %118 = vst [vmem:[#allocation3 + $0x100] sm:$0xff] 0.0
    %119 = vst [vmem:[#allocation3 + $0x108] sm:$0xff] 0.0
    %120 = vst [vmem:[#allocation3 + $0x110] sm:$0xff] 0.0
    %121 = vst [vmem:[#allocation3 + $0x118] sm:$0xff] 0.0
    %v122 = vld [vmem:[#allocation4] sm:$0xff]
    %v123 = vld [vmem:[#allocation4 + $0x8] sm:$0xff]
    %126 = vst [vmem:[#allocation1] ss:$2 sm:$0xff] %v122
    %s127 = scalar_lea.vmem [#allocation1], 16
    %128 = vst [vmem:[%s127] ss:$2 sm:$0xff] %v123
    %v129 = vld.sshfl [vmem:[#allocation1] sm:$0xff pattern:$0x75316420]
    %v130 = vld.sshfl [vmem:[#allocation1 + $0x8] sm:$0xff pattern:$0x75316420]
    %v131 = vld.sshfl [vmem:[#allocation1 + $0x10] sm:$0xff pattern:$0x75316420]
    %v132 = vld.sshfl [vmem:[#allocation1 + $0x18] sm:$0xff pattern:$0x75316420]
    %vm137 = vcmask 1043456
    %v138 = vsel %vm137, %v129, 0.0
    %v139 = vsel %vm137, %v130, 0.0
    %v140 = vadd.f32 %v138, %v139
    %v141 = vsel %vm137, %v131, 0.0
    %v142 = vadd.f32 %v140, %v141
    %v143 = vsel %vm137, %v132, 0.0
    %v144 = vadd.f32 %v142, %v143
    %145 = vadd.xlane.f32.xlu0 %v144
    %v146 = vpop.xlane.xlu0 %145
    %v147 = vmul.f32 %v122, %v122
    %v148 = vmul.f32 %v123, %v123
    %151 = vst [vmem:[#allocation1] ss:$2 sm:$0xff] %v147
    %s152 = scalar_lea.vmem [#allocation1], 16
    %153 = vst [vmem:[%s152] ss:$2 sm:$0xff] %v148
    %v154 = vld.sshfl [vmem:[#allocation1] sm:$0xff pattern:$0x75316420]
    %v155 = vld.sshfl [vmem:[#allocation1 + $0x8] sm:$0xff pattern:$0x75316420]
    %v156 = vld.sshfl [vmem:[#allocation1 + $0x10] sm:$0xff pattern:$0x75316420]
    %v157 = vld.sshfl [vmem:[#allocation1 + $0x18] sm:$0xff pattern:$0x75316420]
    %v162 = vsel %vm137, %v154, 0.0
    %v163 = vsel %vm137, %v155, 0.0
    %v164 = vadd.f32 %v162, %v163
    %v165 = vsel %vm137, %v156, 0.0
    %v166 = vadd.f32 %v164, %v165
    %v167 = vsel %vm137, %v157, 0.0
    %v168 = vadd.f32 %v166, %v167
    %169 = vadd.xlane.f32.xlu0 %v168
    %v170 = vpop.xlane.xlu0 %169
    %v171 = vmul.f32 %v146, 0.001953125
    %v172 = vmul.f32 %v170, 0.001953125
    %v173 = vmul.f32 %v171, %v171
    %v174 = vsub.f32 %v172, %v173
    %v175 = vmax.f32 %v174, 0.0
    %v178 = vunpack.c.l.s4 839922192
    %v179 = vunpack.c.0.s8 %v178
    %v180 = vperm.slane %v171, %v179
    %v182 = vsub.f32 %v122, %v180
    %v183 = vsub.f32 %v123, %v180
    %v184 = vadd.f32 %v175, 1e-05
    %v185 = vrsqrt.pop %v184
    %v186 = vmul.f32 %v185, %v184
    %v187 = vmul.f32 %v186, %v185
    %v188 = vmul.f32 0.5, %v187
    %v189 = vsub.f32 1.5, %v188
    %v190 = vmul.f32 %v185, %v189
    %vm191 = vweird.f32 %v184
    %vm192 = vweird.f32 %v185
    %vm193 = vmor %vm191, %vm192
    %v194 = vsel %vm193, %v185, %v190
    %v197 = vunpack.c.l.s4 839922192
    %v198 = vunpack.c.0.s8 %v197
    %v199 = vperm.slane %v194, %v198
    %v201 = vmul.f32 %v182, %v199
    %v202 = vmul.f32 %v183, %v199
    %v203 = vld [vmem:[%s7] sm:$0xf]
    %205 = vset.pattern.permute.xlu0 0
    %206 = vperm.xlu0 %205, %v203
    %v207 = vpop.permute.xlu0 %206
    %v209 = vunpack.c.l.s4 839922192
    %v210 = vunpack.c.0.s8 %v209
    %v211 = vperm.slane %v207, %v210
    %v213 = vmul.f32 %v201, %v211
    %v214 = vmul.f32 %v202, %v211
    %v215 = vld [vmem:[%s8] sm:$0xf]
    %217 = vset.pattern.permute.xlu0 0
    %218 = vperm.xlu0 %217, %v215
    %v219 = vpop.permute.xlu0 %218
    %v221 = vunpack.c.l.s4 839922192
    %v222 = vunpack.c.0.s8 %v221
    %v223 = vperm.slane %v219, %v222
    %v225 = vadd.f32 %v213, %v223
    %v226 = vadd.f32 %v214, %v223
    %v227 = vmax.f32 %v225, 0.0
    %v228 = vmax.f32 %v226, 0.0
    %229 = vst [vmem:[#allocation2 + $0x4] sm:$0xff] %v227
    %230 = vst [vmem:[#allocation2 + $0xc] sm:$0xff] %v228
    %v231 = vld [vmem:[#allocation2] sm:$0xff]
    %v232 = vld [vmem:[#allocation2 + $0x8] sm:$0xff]
    %v233 = vld [vmem:[#allocation2 + $0x10] sm:$0xf]
    %v234 = vld [vmem:[%s11] ss:$8 sm:$0xf]
    %v236 = vperm.slane %v234, 0
    %v237 = vperm.slane %v234, 1
    %v238 = vperm.slane %v234, 2
    %v239 = vperm.slane %v234, 3
    %v240 = vrot.slane %v237, 4
    %v241 = vrot.slane %v239, 4
    %v242 = vsel %vm137, %v236, %v240
    %v243 = vsel %vm137, %v238, %v241
    %244 = vrot.lane.b32.xlu0 %v242, 111
    %v245 = vpop.permute.xlu0 %244
    %246 = vrot.lane.b32.xlu0 %v243, 111
    %v247 = vpop.permute.xlu0 %246
    %v248 = vrot.slane %v245, 4
    %v249 = vrot.slane %v247, 4
    %vm250 = vcmask 908288
    %v251 = vsel %vm250, %v248, %v245
    %v252 = vsel %vm137, %v248, %v249
    %v253 = vsel %vm250, %v252, %v247
    %v257 = vmul.f32 %v231, %v251
    %v258 = vmul.f32 %v232, %v253
    %v259 = vmul.f32 %v233, %v249
    %263 = vst [vmem:[#allocation1] ss:$2 sm:$0xff] %v257
    %s264 = scalar_lea.vmem [#allocation1], 16
    %265 = vst [vmem:[%s264] ss:$2 sm:$0xff] %v258
    %s266 = scalar_lea.vmem [#allocation1], 32
    %267 = vst [vmem:[%s266] ss:$2 sm:$0xff] %v259
    %v268 = vld.sshfl [vmem:[#allocation1] sm:$0xff pattern:$0x75316420]
    %v269 = vld.sshfl [vmem:[#allocation1 + $0x8] sm:$0xff pattern:$0x75316420]
    %v270 = vld.sshfl [vmem:[#allocation1 + $0x10] sm:$0xff pattern:$0x75316420]
    %v271 = vld.sshfl [vmem:[#allocation1 + $0x18] sm:$0xff pattern:$0x75316420]
    %v272 = vld.sshfl [vmem:[#allocation1 + $0x20] sm:$0xff pattern:$0x75316420]
    %273 = vrot.lane.b32.xlu0 %v268, 17
    %v274 = vpop.permute.xlu0 %273
    %275 = vrot.lane.b32.xlu0 %v269, 17
    %v276 = vpop.permute.xlu0 %275
    %277 = vrot.lane.b32.xlu0 %v270, 17
    %v278 = vpop.permute.xlu0 %277
    %279 = vrot.lane.b32.xlu0 %v271, 17
    %v280 = vpop.permute.xlu0 %279
    %281 = vrot.lane.b32.xlu0 %v272, 17
    %v282 = vpop.permute.xlu0 %281
    %vm283 = vcmask 138240
    %v284 = vsel %vm283, %v274, %v276
    %v285 = vsel %vm283, %v276, %v278
    %v286 = vsel %vm283, %v278, %v280
    %v287 = vsel %vm283, %v280, %v282
    %292 = vst [vmem:[#allocation3] sm:$0xf] %v284
    %293 = vst [vmem:[#allocation3 + $0x8] sm:$0xf] %v285
    %294 = vst [vmem:[#allocation3 + $0x10] sm:$0xf] %v286
    %295 = vst [vmem:[#allocation3 + $0x18] sm:$0xf] %v287
    %v296 = vld [vmem:[#allocation2] sm:$0xff]
    %v297 = vld [vmem:[#allocation2 + $0x8] sm:$0xff]
    %v298 = vld [vmem:[#allocation2 + $0x10] sm:$0xf]
    %s299 = scalar_lea.vmem %s11, 1
    %v300 = vld [vmem:[%s299] ss:$8 sm:$0xf]
    %v302 = vperm.slane %v300, 0
    %v303 = vperm.slane %v300, 1
    %v304 = vperm.slane %v300, 2
    %v305 = vperm.slane %v300, 3
    %v306 = vrot.slane %v303, 4
    %v307 = vrot.slane %v305, 4
    %v308 = vsel %vm137, %v302, %v306
    %v309 = vsel %vm137, %v304, %v307
    %310 = vrot.lane.b32.xlu0 %v308, 112
    %v311 = vpop.permute.xlu0 %310
    %312 = vrot.lane.b32.xlu0 %v309, 112
    %v313 = vpop.permute.xlu0 %312
    %v314 = vrot.slane %v311, 4
    %v315 = vrot.slane %v313, 4
    %vm316 = vcmask 916480
    %v317 = vsel %vm316, %v314, %v311
    %v318 = vsel %vm137, %v314, %v315
    %v319 = vsel %vm316, %v318, %v313
    %v323 = vmul.f32 %v296, %v317
    %v324 = vmul.f32 %v297, %v319
    %v325 = vmul.f32 %v298, %v315
    %329 = vst [vmem:[#allocation1] ss:$2 sm:$0xff] %v323
    %s330 = scalar_lea.vmem [#allocation1], 16
    %331 = vst [vmem:[%s330] ss:$2 sm:$0xff] %v324
    %s332 = scalar_lea.vmem [#allocation1], 32
    %333 = vst [vmem:[%s332] ss:$2 sm:$0xff] %v325
    %v334 = vld.sshfl [vmem:[#allocation1] sm:$0xff pattern:$0x75316420]
    %v335 = vld.sshfl [vmem:[#allocation1 + $0x8] sm:$0xff pattern:$0x75316420]
    %v336 = vld.sshfl [vmem:[#allocation1 + $0x10] sm:$0xff pattern:$0x75316420]
    %v337 = vld.sshfl [vmem:[#allocation1 + $0x18] sm:$0xff pattern:$0x75316420]
    %v338 = vld.sshfl [vmem:[#allocation1 + $0x20] sm:$0xff pattern:$0x75316420]
    %339 = vrot.lane.b32.xlu0 %v334, 16
    %v340 = vpop.permute.xlu0 %339
    %341 = vrot.lane.b32.xlu0 %v335, 16
    %v342 = vpop.permute.xlu0 %341
    %343 = vrot.lane.b32.xlu0 %v336, 16
    %v344 = vpop.permute.xlu0 %343
    %345 = vrot.lane.b32.xlu0 %v337, 16
    %v346 = vpop.permute.xlu0 %345
    %347 = vrot.lane.b32.xlu0 %v338, 16
    %v348 = vpop.permute.xlu0 %347
    %vm349 = vcmask 130048
    %v350 = vsel %vm349, %v340, %v342
    %v351 = vsel %vm349, %v342, %v344
    %v352 = vsel %vm349, %v344, %v346
    %v353 = vsel %vm349, %v346, %v348
    %358 = vst [vmem:[#allocation3 + $0x20] sm:$0xf] %v350
    %359 = vst [vmem:[#allocation3 + $0x28] sm:$0xf] %v351
    %360 = vst [vmem:[#allocation3 + $0x30] sm:$0xf] %v352
    %361 = vst [vmem:[#allocation3 + $0x38] sm:$0xf] %v353
    %v362 = vld [vmem:[#allocation2] sm:$0xff]
    %v363 = vld [vmem:[#allocation2 + $0x8] sm:$0xff]
    %v364 = vld [vmem:[#allocation2 + $0x10] sm:$0xf]
    %s365 = scalar_lea.vmem %s11, 2
    %v366 = vld [vmem:[%s365] ss:$8 sm:$0xf]
    %v368 = vperm.slane %v366, 0
    %v369 = vperm.slane %v366, 1
    %v370 = vperm.slane %v366, 2
    %v371 = vperm.slane %v366, 3
    %v372 = vrot.slane %v369, 4
    %v373 = vrot.slane %v371, 4
    %v374 = vsel %vm137, %v368, %v372
    %v375 = vsel %vm137, %v370, %v373
    %376 = vrot.lane.b32.xlu0 %v374, 113
    %v377 = vpop.permute.xlu0 %376
    %378 = vrot.lane.b32.xlu0 %v375, 113
    %v379 = vpop.permute.xlu0 %378
    %v380 = vrot.slane %v377, 4
    %v381 = vrot.slane %v379, 4
    %vm382 = vcmask 924672
    %v383 = vsel %vm382, %v380, %v377
    %v384 = vsel %vm137, %v380, %v381
    %v385 = vsel %vm382, %v384, %v379
    %v389 = vmul.f32 %v362, %v383
    %v390 = vmul.f32 %v363, %v385
    %v391 = vmul.f32 %v364, %v381
    %395 = vst [vmem:[#allocation1] ss:$2 sm:$0xff] %v389
    %s396 = scalar_lea.vmem [#allocation1], 16
    %397 = vst [vmem:[%s396] ss:$2 sm:$0xff] %v390
    %s398 = scalar_lea.vmem [#allocation1], 32
    %399 = vst [vmem:[%s398] ss:$2 sm:$0xff] %v391
    %v400 = vld.sshfl [vmem:[#allocation1] sm:$0xff pattern:$0x75316420]
    %v401 = vld.sshfl [vmem:[#allocation1 + $0x8] sm:$0xff pattern:$0x75316420]
    %v402 = vld.sshfl [vmem:[#allocation1 + $0x10] sm:$0xff pattern:$0x75316420]
    %v403 = vld.sshfl [vmem:[#allocation1 + $0x18] sm:$0xff pattern:$0x75316420]
    %v404 = vld.sshfl [vmem:[#allocation1 + $0x20] sm:$0xff pattern:$0x75316420]
    %405 = vrot.lane.b32.xlu0 %v400, 15
    %v406 = vpop.permute.xlu0 %405
    %407 = vrot.lane.b32.xlu0 %v401, 15
    %v408 = vpop.permute.xlu0 %407
    %409 = vrot.lane.b32.xlu0 %v402, 15
    %v410 = vpop.permute.xlu0 %409
    %411 = vrot.lane.b32.xlu0 %v403, 15
    %v412 = vpop.permute.xlu0 %411
    %413 = vrot.lane.b32.xlu0 %v404, 15
    %v414 = vpop.permute.xlu0 %413
    %vm415 = vcmask 121856
    %v416 = vsel %vm415, %v406, %v408
    %v417 = vsel %vm415, %v408, %v410
    %v418 = vsel %vm415, %v410, %v412
    %v419 = vsel %vm415, %v412, %v414
    %424 = vst [vmem:[#allocation3 + $0x40] sm:$0xf] %v416
    %425 = vst [vmem:[#allocation3 + $0x48] sm:$0xf] %v417
    %426 = vst [vmem:[#allocation3 + $0x50] sm:$0xf] %v418
    %427 = vst [vmem:[#allocation3 + $0x58] sm:$0xf] %v419
    %v428 = vld [vmem:[#allocation2] sm:$0xff]
    %v429 = vld [vmem:[#allocation2 + $0x8] sm:$0xff]
    %v430 = vld [vmem:[#allocation2 + $0x10] sm:$0xf]
    %s431 = scalar_lea.vmem %s11, 3
    %v432 = vld [vmem:[%s431] ss:$8 sm:$0xf]
    %v434 = vperm.slane %v432, 0
    %v435 = vperm.slane %v432, 1
    %v436 = vperm.slane %v432, 2
    %v437 = vperm.slane %v432, 3
    %v438 = vrot.slane %v435, 4
    %v439 = vrot.slane %v437, 4
    %v440 = vsel %vm137, %v434, %v438
    %v441 = vsel %vm137, %v436, %v439
    %442 = vrot.lane.b32.xlu0 %v440, 127
    %v443 = vpop.permute.xlu0 %442
    %444 = vrot.lane.b32.xlu0 %v441, 127
    %v445 = vpop.permute.xlu0 %444
    %v446 = vrot.slane %v443, 4
    %v447 = vrot.slane %v445, 4
    %vm448 = vcmask 1039360
    %v449 = vsel %vm448, %v446, %v443
    %v450 = vsel %vm137, %v446, %v447
    %v451 = vsel %vm448, %v450, %v445
    %v455 = vmul.f32 %v428, %v449
    %v456 = vmul.f32 %v429, %v451
    %v457 = vmul.f32 %v430, %v447
    %461 = vst [vmem:[#allocation1] ss:$2 sm:$0xff] %v455
    %s462 = scalar_lea.vmem [#allocation1], 16
    %463 = vst [vmem:[%s462] ss:$2 sm:$0xff] %v456
    %s464 = scalar_lea.vmem [#allocation1], 32
    %465 = vst [vmem:[%s464] ss:$2 sm:$0xff] %v457
    %v466 = vld.sshfl [vmem:[#allocation1] sm:$0xff pattern:$0x75316420]
    %v467 = vld.sshfl [vmem:[#allocation1 + $0x8] sm:$0xff pattern:$0x75316420]
    %v468 = vld.sshfl [vmem:[#allocation1 + $0x10] sm:$0xff pattern:$0x75316420]
    %v469 = vld.sshfl [vmem:[#allocation1 + $0x18] sm:$0xff pattern:$0x75316420]
    %v470 = vld.sshfl [vmem:[#allocation1 + $0x20] sm:$0xff pattern:$0x75316420]
    %471 = vrot.lane.b32.xlu0 %v466, 1
    %v472 = vpop.permute.xlu0 %471
    %473 = vrot.lane.b32.xlu0 %v467, 1
    %v474 = vpop.permute.xlu0 %473
    %475 = vrot.lane.b32.xlu0 %v468, 1
    %v476 = vpop.permute.xlu0 %475
    %477 = vrot.lane.b32.xlu0 %v469, 1
    %v478 = vpop.permute.xlu0 %477
    %479 = vrot.lane.b32.xlu0 %v470, 1
    %v480 = vpop.permute.xlu0 %479
    %vm481 = vcmask 7168
    %v482 = vsel %vm481, %v472, %v474
    %v483 = vsel %vm481, %v474, %v476
    %v484 = vsel %vm481, %v476, %v478
    %v485 = vsel %vm481, %v478, %v480
    %490 = vst [vmem:[#allocation3 + $0x60] sm:$0xf] %v482
    %491 = vst [vmem:[#allocation3 + $0x68] sm:$0xf] %v483
    %492 = vst [vmem:[#allocation3 + $0x70] sm:$0xf] %v484
    %493 = vst [vmem:[#allocation3 + $0x78] sm:$0xf] %v485
    %v494 = vld [vmem:[#allocation2 + $0x4] sm:$0xff]
    %v495 = vld [vmem:[#allocation2 + $0xc] sm:$0xff]
    %s496 = scalar_lea.vmem %s11, 4
    %v497 = vld [vmem:[%s496] ss:$8 sm:$0xf]
    %v499 = vperm.slane %v497, 0
    %v500 = vperm.slane %v497, 1
    %v501 = vperm.slane %v497, 2
    %v502 = vperm.slane %v497, 3
    %v503 = vrot.slane %v500, 4
    %v504 = vrot.slane %v502, 4
    %v505 = vsel %vm137, %v499, %v503
    %v506 = vsel %vm137, %v501, %v504
    %v509 = vmul.f32 %v494, %v505
    %v510 = vmul.f32 %v495, %v506
    %513 = vst [vmem:[#allocation1] ss:$2 sm:$0xff] %v509
    %s514 = scalar_lea.vmem [#allocation1], 16
    %515 = vst [vmem:[%s514] ss:$2 sm:$0xff] %v510
    %v516 = vld.sshfl [vmem:[#allocation1] sm:$0xff pattern:$0x75316420]
    %v517 = vld.sshfl [vmem:[#allocation1 + $0x8] sm:$0xff pattern:$0x75316420]
    %v518 = vld.sshfl [vmem:[#allocation1 + $0x10] sm:$0xff pattern:$0x75316420]
    %v519 = vld.sshfl [vmem:[#allocation1 + $0x18] sm:$0xff pattern:$0x75316420]
    %524 = vst [vmem:[#allocation3 + $0x80] sm:$0xf] %v516
    %525 = vst [vmem:[#allocation3 + $0x88] sm:$0xf] %v517
    %526 = vst [vmem:[#allocation3 + $0x90] sm:$0xf] %v518
    %527 = vst [vmem:[#allocation3 + $0x98] sm:$0xf] %v519
    %v528 = vld [vmem:[#allocation2 + $0x4] sm:$0xff]
    %v529 = vld [vmem:[#allocation2 + $0xc] sm:$0xff]
    %v530 = vld [vmem:[#allocation2 + $0x14] sm:$0xf]
    %s531 = scalar_lea.vmem %s11, 5
    %v532 = vld [vmem:[%s531] ss:$8 sm:$0xf]
    %v534 = vperm.slane %v532, 0
    %v535 = vperm.slane %v532, 1
    %v536 = vperm.slane %v532, 2
    %v537 = vperm.slane %v532, 3
    %v538 = vrot.slane %v535, 4
    %v539 = vrot.slane %v537, 4
    %v540 = vsel %vm137, %v534, %v538
    %v541 = vsel %vm137, %v536, %v539
    %542 = vrot.lane.b32.xlu0 %v540, 1
    %v543 = vpop.permute.xlu0 %542
    %544 = vrot.lane.b32.xlu0 %v541, 1
    %v545 = vpop.permute.xlu0 %544
    %v546 = vrot.slane %v543, 4
    %v547 = vrot.slane %v545, 4
    %v548 = vsel %vm481, %v546, %v543
    %v549 = vsel %vm137, %v546, %v547
    %v550 = vsel %vm481, %v549, %v545
    %v554 = vmul.f32 %v528, %v548
    %v555 = vmul.f32 %v529, %v550
    %v556 = vmul.f32 %v530, %v547
    %560 = vst [vmem:[#allocation1] ss:$2 sm:$0xff] %v554
    %s561 = scalar_lea.vmem [#allocation1], 16
    %562 = vst [vmem:[%s561] ss:$2 sm:$0xff] %v555
    %s563 = scalar_lea.vmem [#allocation1], 32
    %564 = vst [vmem:[%s563] ss:$2 sm:$0xff] %v556
    %v565 = vld.sshfl [vmem:[#allocation1] sm:$0xff pattern:$0x75316420]
    %v566 = vld.sshfl [vmem:[#allocation1 + $0x8] sm:$0xff pattern:$0x75316420]
    %v567 = vld.sshfl [vmem:[#allocation1 + $0x10] sm:$0xff pattern:$0x75316420]
    %v568 = vld.sshfl [vmem:[#allocation1 + $0x18] sm:$0xff pattern:$0x75316420]
    %v569 = vld.sshfl [vmem:[#allocation1 + $0x20] sm:$0xff pattern:$0x75316420]
    %570 = vrot.lane.b32.xlu0 %v565, 127
    %v571 = vpop.permute.xlu0 %570
    %572 = vrot.lane.b32.xlu0 %v566, 127
    %v573 = vpop.permute.xlu0 %572
    %574 = vrot.lane.b32.xlu0 %v567, 127
    %v575 = vpop.permute.xlu0 %574
    %576 = vrot.lane.b32.xlu0 %v568, 127
    %v577 = vpop.permute.xlu0 %576
    %578 = vrot.lane.b32.xlu0 %v569, 127
    %v579 = vpop.permute.xlu0 %578
    %v580 = vsel %vm448, %v571, %v573
    %v581 = vsel %vm448, %v573, %v575
    %v582 = vsel %vm448, %v575, %v577
    %v583 = vsel %vm448, %v577, %v579
    %588 = vst [vmem:[#allocation3 + $0xa0] sm:$0xf] %v580
    %589 = vst [vmem:[#allocation3 + $0xa8] sm:$0xf] %v581
    %590 = vst [vmem:[#allocation3 + $0xb0] sm:$0xf] %v582
    %591 = vst [vmem:[#allocation3 + $0xb8] sm:$0xf] %v583
    %v592 = vld [vmem:[#allocation2 + $0x4] sm:$0xff]
    %v593 = vld [vmem:[#allocation2 + $0xc] sm:$0xff]
    %v594 = vld [vmem:[#allocation2 + $0x14] sm:$0xf]
    %s595 = scalar_lea.vmem %s11, 6
    %v596 = vld [vmem:[%s595] ss:$8 sm:$0xf]
    %v598 = vperm.slane %v596, 0
    %v599 = vperm.slane %v596, 1
    %v600 = vperm.slane %v596, 2
    %v601 = vperm.slane %v596, 3
    %v602 = vrot.slane %v599, 4
    %v603 = vrot.slane %v601, 4
    %v604 = vsel %vm137, %v598, %v602
    %v605 = vsel %vm137, %v600, %v603
    %606 = vrot.lane.b32.xlu0 %v604, 15
    %v607 = vpop.permute.xlu0 %606
    %608 = vrot.lane.b32.xlu0 %v605, 15
    %v609 = vpop.permute.xlu0 %608
    %v610 = vrot.slane %v607, 4
    %v611 = vrot.slane %v609, 4
    %v612 = vsel %vm415, %v610, %v607
    %v613 = vsel %vm137, %v610, %v611
    %v614 = vsel %vm415, %v613, %v609
    %v618 = vmul.f32 %v592, %v612
    %v619 = vmul.f32 %v593, %v614
    %v620 = vmul.f32 %v594, %v611
    %624 = vst [vmem:[#allocation1] ss:$2 sm:$0xff] %v618
    %s625 = scalar_lea.vmem [#allocation1], 16
    %626 = vst [vmem:[%s625] ss:$2 sm:$0xff] %v619
    %s627 = scalar_lea.vmem [#allocation1], 32
    %628 = vst [vmem:[%s627] ss:$2 sm:$0xff] %v620
    %v629 = vld.sshfl [vmem:[#allocation1] sm:$0xff pattern:$0x75316420]
    %v630 = vld.sshfl [vmem:[#allocation1 + $0x8] sm:$0xff pattern:$0x75316420]
    %v631 = vld.sshfl [vmem:[#allocation1 + $0x10] sm:$0xff pattern:$0x75316420]
    %v632 = vld.sshfl [vmem:[#allocation1 + $0x18] sm:$0xff pattern:$0x75316420]
    %v633 = vld.sshfl [vmem:[#allocation1 + $0x20] sm:$0xff pattern:$0x75316420]
    %634 = vrot.lane.b32.xlu0 %v629, 113
    %v635 = vpop.permute.xlu0 %634
    %636 = vrot.lane.b32.xlu0 %v630, 113
    %v637 = vpop.permute.xlu0 %636
    %638 = vrot.lane.b32.xlu0 %v631, 113
    %v639 = vpop.permute.xlu0 %638
    %640 = vrot.lane.b32.xlu0 %v632, 113
    %v641 = vpop.permute.xlu0 %640
    %642 = vrot.lane.b32.xlu0 %v633, 113
    %v643 = vpop.permute.xlu0 %642
    %v644 = vsel %vm382, %v635, %v637
    %v645 = vsel %vm382, %v637, %v639
    %v646 = vsel %vm382, %v639, %v641
    %v647 = vsel %vm382, %v641, %v643
    %652 = vst [vmem:[#allocation3 + $0xc0] sm:$0xf] %v644
    %653 = vst [vmem:[#allocation3 + $0xc8] sm:$0xf] %v645
    %654 = vst [vmem:[#allocation3 + $0xd0] sm:$0xf] %v646
    %655 = vst [vmem:[#allocation3 + $0xd8] sm:$0xf] %v647
    %v656 = vld [vmem:[#allocation2 + $0x4] sm:$0xff]
    %v657 = vld [vmem:[#allocation2 + $0xc] sm:$0xff]
    %v658 = vld [vmem:[#allocation2 + $0x14] sm:$0xf]
    %s659 = scalar_lea.vmem %s11, 7
    %v660 = vld [vmem:[%s659] ss:$8 sm:$0xf]
    %v662 = vperm.slane %v660, 0
    %v663 = vperm.slane %v660, 1
    %v664 = vperm.slane %v660, 2
    %v665 = vperm.slane %v660, 3
    %v666 = vrot.slane %v663, 4
    %v667 = vrot.slane %v665, 4
    %v668 = vsel %vm137, %v662, %v666
    %v669 = vsel %vm137, %v664, %v667
    %670 = vrot.lane.b32.xlu0 %v668, 16
    %v671 = vpop.permute.xlu0 %670
    %672 = vrot.lane.b32.xlu0 %v669, 16
    %v673 = vpop.permute.xlu0 %672
    %v674 = vrot.slane %v671, 4
    %v675 = vrot.slane %v673, 4
    %v676 = vsel %vm349, %v674, %v671
    %v677 = vsel %vm137, %v674, %v675
    %v678 = vsel %vm349, %v677, %v673
    %v682 = vmul.f32 %v656, %v676
    %v683 = vmul.f32 %v657, %v678
    %v684 = vmul.f32 %v658, %v675
    %688 = vst [vmem:[#allocation1] ss:$2 sm:$0xff] %v682
    %s689 = scalar_lea.vmem [#allocation1], 16
    %690 = vst [vmem:[%s689] ss:$2 sm:$0xff] %v683
    %s691 = scalar_lea.vmem [#allocation1], 32
    %692 = vst [vmem:[%s691] ss:$2 sm:$0xff] %v684
    %v693 = vld.sshfl [vmem:[#allocation1] sm:$0xff pattern:$0x75316420]
    %v694 = vld.sshfl [vmem:[#allocation1 + $0x8] sm:$0xff pattern:$0x75316420]
    %v695 = vld.sshfl [vmem:[#allocation1 + $0x10] sm:$0xff pattern:$0x75316420]
    %v696 = vld.sshfl [vmem:[#allocation1 + $0x18] sm:$0xff pattern:$0x75316420]
    %v697 = vld.sshfl [vmem:[#allocation1 + $0x20] sm:$0xff pattern:$0x75316420]
    %698 = vrot.lane.b32.xlu0 %v693, 112
    %v699 = vpop.permute.xlu0 %698
    %700 = vrot.lane.b32.xlu0 %v694, 112
    %v701 = vpop.permute.xlu0 %700
    %702 = vrot.lane.b32.xlu0 %v695, 112
    %v703 = vpop.permute.xlu0 %702
    %704 = vrot.lane.b32.xlu0 %v696, 112
    %v705 = vpop.permute.xlu0 %704
    %706 = vrot.lane.b32.xlu0 %v697, 112
    %v707 = vpop.permute.xlu0 %706
    %v708 = vsel %vm316, %v699, %v701
    %v709 = vsel %vm316, %v701, %v703
    %v710 = vsel %vm316, %v703, %v705
    %v711 = vsel %vm316, %v705, %v707
    %716 = vst [vmem:[#allocation3 + $0xe0] sm:$0xf] %v708
    %717 = vst [vmem:[#allocation3 + $0xe8] sm:$0xf] %v709
    %718 = vst [vmem:[#allocation3 + $0xf0] sm:$0xf] %v710
    %719 = vst [vmem:[#allocation3 + $0xf8] sm:$0xf] %v711
    %v720 = vld [vmem:[#allocation2 + $0x4] sm:$0xff]
    %v721 = vld [vmem:[#allocation2 + $0xc] sm:$0xff]
    %v722 = vld [vmem:[#allocation2 + $0x14] sm:$0xf]
    %s723 = scalar_lea.vmem %s11, 32
    %v724 = vld [vmem:[%s723] ss:$8 sm:$0xf]
    %v726 = vperm.slane %v724, 0
    %v727 = vperm.slane %v724, 1
    %v728 = vperm.slane %v724, 2
    %v729 = vperm.slane %v724, 3
    %v730 = vrot.slane %v727, 4
    %v731 = vrot.slane %v729, 4
    %v732 = vsel %vm137, %v726, %v730
    %v733 = vsel %vm137, %v728, %v731
    %734 = vrot.lane.b32.xlu0 %v732, 17
    %v735 = vpop.permute.xlu0 %734
    %736 = vrot.lane.b32.xlu0 %v733, 17
    %v737 = vpop.permute.xlu0 %736
    %v738 = vrot.slane %v735, 4
    %v739 = vrot.slane %v737, 4
    %v740 = vsel %vm283, %v738, %v735
    %v741 = vsel %vm137, %v738, %v739
    %v742 = vsel %vm283, %v741, %v737
    %v746 = vmul.f32 %v720, %v740
    %v747 = vmul.f32 %v721, %v742
    %v748 = vmul.f32 %v722, %v739
    %752 = vst [vmem:[#allocation1] ss:$2 sm:$0xff] %v746
    %s753 = scalar_lea.vmem [#allocation1], 16
    %754 = vst [vmem:[%s753] ss:$2 sm:$0xff] %v747
    %s755 = scalar_lea.vmem [#allocation1], 32
    %756 = vst [vmem:[%s755] ss:$2 sm:$0xff] %v748
    %v757 = vld.sshfl [vmem:[#allocation1] sm:$0xff pattern:$0x75316420]
    %v758 = vld.sshfl [vmem:[#allocation1 + $0x8] sm:$0xff pattern:$0x75316420]
    %v759 = vld.sshfl [vmem:[#allocation1 + $0x10] sm:$0xff pattern:$0x75316420]
    %v760 = vld.sshfl [vmem:[#allocation1 + $0x18] sm:$0xff pattern:$0x75316420]
    %v761 = vld.sshfl [vmem:[#allocation1 + $0x20] sm:$0xff pattern:$0x75316420]
    %762 = vrot.lane.b32.xlu0 %v757, 111
    %v763 = vpop.permute.xlu0 %762
    %764 = vrot.lane.b32.xlu0 %v758, 111
    %v765 = vpop.permute.xlu0 %764
    %766 = vrot.lane.b32.xlu0 %v759, 111
    %v767 = vpop.permute.xlu0 %766
    %768 = vrot.lane.b32.xlu0 %v760, 111
    %v769 = vpop.permute.xlu0 %768
    %770 = vrot.lane.b32.xlu0 %v761, 111
    %v771 = vpop.permute.xlu0 %770
    %v772 = vsel %vm250, %v763, %v765
    %v773 = vsel %vm250, %v765, %v767
    %v774 = vsel %vm250, %v767, %v769
    %v775 = vsel %vm250, %v769, %v771
    %780 = vst [vmem:[#allocation3 + $0x100] sm:$0xf] %v772
    %781 = vst [vmem:[#allocation3 + $0x108] sm:$0xf] %v773
    %782 = vst [vmem:[#allocation3 + $0x110] sm:$0xf] %v774
    %783 = vst [vmem:[#allocation3 + $0x118] sm:$0xf] %v775
    %v784 = vld [vmem:[#allocation7] sm:$0xf]
    %v785 = vld [vmem:[#allocation3] sm:$0xff]
    %v786 = vld [vmem:[#allocation3 + $0x8] sm:$0xff]
    %v787 = vld [vmem:[#allocation3 + $0x10] sm:$0xff]
    %v788 = vld [vmem:[#allocation3 + $0x18] sm:$0xff]
    %v789 = vld [vmem:[#allocation3 + $0x20] sm:$0xff]
    %v790 = vld [vmem:[#allocation3 + $0x28] sm:$0xff]
    %v791 = vld [vmem:[#allocation3 + $0x30] sm:$0xff]
    %v792 = vld [vmem:[#allocation3 + $0x38] sm:$0xff]
    %v793 = vld [vmem:[#allocation3 + $0x40] sm:$0xff]
    %v794 = vld [vmem:[#allocation3 + $0x48] sm:$0xff]
    %v795 = vld [vmem:[#allocation3 + $0x50] sm:$0xff]
    %v796 = vld [vmem:[#allocation3 + $0x58] sm:$0xff]
    %v797 = vld [vmem:[#allocation3 + $0x60] sm:$0xff]
    %v798 = vld [vmem:[#allocation3 + $0x68] sm:$0xff]
    %v799 = vld [vmem:[#allocation3 + $0x70] sm:$0xff]
    %v800 = vld [vmem:[#allocation3 + $0x78] sm:$0xff]
    %v801 = vld [vmem:[#allocation3 + $0x80] sm:$0xff]
    %v802 = vld [vmem:[#allocation3 + $0x88] sm:$0xff]
    %v803 = vld [vmem:[#allocation3 + $0x90] sm:$0xff]
    %v804 = vld [vmem:[#allocation3 + $0x98] sm:$0xff]
    %v805 = vld [vmem:[#allocation3 + $0xa0] sm:$0xff]
    %v806 = vld [vmem:[#allocation3 + $0xa8] sm:$0xff]
    %v807 = vld [vmem:[#allocation3 + $0xb0] sm:$0xff]
    %v808 = vld [vmem:[#allocation3 + $0xb8] sm:$0xff]
    %v809 = vld [vmem:[#allocation3 + $0xc0] sm:$0xff]
    %v810 = vld [vmem:[#allocation3 + $0xc8] sm:$0xff]
    %v811 = vld [vmem:[#allocation3 + $0xd0] sm:$0xff]
    %v812 = vld [vmem:[#allocation3 + $0xd8] sm:$0xff]
    %v813 = vld [vmem:[#allocation3 + $0xe0] sm:$0xff]
    %v814 = vld [vmem:[#allocation3 + $0xe8] sm:$0xff]
    %v815 = vld [vmem:[#allocation3 + $0xf0] sm:$0xff]
    %v816 = vld [vmem:[#allocation3 + $0xf8] sm:$0xff]
    %v817 = vld [vmem:[#allocation3 + $0x100] sm:$0xff]
    %v818 = vld [vmem:[#allocation3 + $0x108] sm:$0xff]
    %v819 = vld [vmem:[#allocation3 + $0x110] sm:$0xff]
    %v820 = vld [vmem:[#allocation3 + $0x118] sm:$0xff]
    %v821 = vld [vmem:[%s2] sm:$0xf]
    %823 = vset.pattern.permute.xlu0 0
    %824 = vperm.xlu0 %823, %v821
    %v825 = vpop.permute.xlu0 %824
    %vm827 = vcmask 588800
    %v829 = vsel %vm827, %v784, 0
    %831 = vmatpush.msra.mxu0 0.0
    %832 = vmatpush.msra.mxu0 0.0
    %833 = vmatpush.msra.mxu0 0.0
    %834 = vmatpush.msra.mxu0 0.0
    %835 = vmatpush.msra.mxu0 0.0
    %836 = vmatpush.msra.mxu0 0.0
    %837 = vmatpush.msra.mxu0 0.0
    %838 = vmatpush.msra.mxu0 %v817
    %839 = vmatpush.msra.mxu0 %v813
    %840 = vmatpush.msra.mxu0 %v809
    %841 = vmatpush.msra.mxu0 %v805
    %842 = vmatpush.msra.mxu0 %v801
    %843 = vmatpush.msra.mxu0 %v797
    %844 = vmatpush.msra.mxu0 %v793
    %845 = vmatpush.msra.mxu0 %v789
    %846 = vmatpush.msra.mxu0 %v785
    %847 = vmatmul.f32.gmra.mxu0 %v829
    %v848 = vpop.f32.mrf.mxu0
    %v849 = vadd.f32 %v825, %v848
    %850 = vdwg.mxu0
    %851 = vmatpush.msra.mxu0 0.0
    %852 = vmatpush.msra.mxu0 0.0
    %853 = vmatpush.msra.mxu0 0.0
    %854 = vmatpush.msra.mxu0 0.0
    %855 = vmatpush.msra.mxu0 0.0
    %856 = vmatpush.msra.mxu0 0.0
    %857 = vmatpush.msra.mxu0 0.0
    %858 = vmatpush.msra.mxu0 %v818
    %859 = vmatpush.msra.mxu0 %v814
    %860 = vmatpush.msra.mxu0 %v810
    %861 = vmatpush.msra.mxu0 %v806
    %862 = vmatpush.msra.mxu0 %v802
    %863 = vmatpush.msra.mxu0 %v798
    %864 = vmatpush.msra.mxu0 %v794
    %865 = vmatpush.msra.mxu0 %v790
    %866 = vmatpush.msra.mxu0 %v786
    %867 = vmatmul.f32.gmra.mxu0 %v829
    %v868 = vpop.f32.mrf.mxu0
    %v869 = vadd.f32 %v825, %v868
    %870 = vdwg.mxu0
    %871 = vmatpush.msra.mxu0 0.0
    %872 = vmatpush.msra.mxu0 0.0
    %873 = vmatpush.msra.mxu0 0.0
    %874 = vmatpush.msra.mxu0 0.0
    %875 = vmatpush.msra.mxu0 0.0
    %876 = vmatpush.msra.mxu0 0.0
    %877 = vmatpush.msra.mxu0 0.0
    %878 = vmatpush.msra.mxu0 %v819
    %879 = vmatpush.msra.mxu0 %v815
    %880 = vmatpush.msra.mxu0 %v811
    %881 = vmatpush.msra.mxu0 %v807
    %882 = vmatpush.msra.mxu0 %v803
    %883 = vmatpush.msra.mxu0 %v799
    %884 = vmatpush.msra.mxu0 %v795
    %885 = vmatpush.msra.mxu0 %v791
    %886 = vmatpush.msra.mxu0 %v787
    %887 = vmatmul.f32.gmra.mxu0 %v829
    %v888 = vpop.f32.mrf.mxu0
    %v889 = vadd.f32 %v825, %v888
    %890 = vdwg.mxu0
    %891 = vmatpush.msra.mxu0 0.0
    %892 = vmatpush.msra.mxu0 0.0
    %893 = vmatpush.msra.mxu0 0.0
    %894 = vmatpush.msra.mxu0 0.0
    %895 = vmatpush.msra.mxu0 0.0
    %896 = vmatpush.msra.mxu0 0.0
    %897 = vmatpush.msra.mxu0 0.0
    %898 = vmatpush.msra.mxu0 %v820
    %899 = vmatpush.msra.mxu0 %v816
    %900 = vmatpush.msra.mxu0 %v812
    %901 = vmatpush.msra.mxu0 %v808
    %902 = vmatpush.msra.mxu0 %v804
    %903 = vmatpush.msra.mxu0 %v800
    %904 = vmatpush.msra.mxu0 %v796
    %905 = vmatpush.msra.mxu0 %v792
    %906 = vmatpush.msra.mxu0 %v788
    %907 = vmatmul.f32.gmra.mxu0 %v829
    %v908 = vpop.f32.mrf.mxu0
    %v909 = vadd.f32 %v825, %v908
    %910 = vdwg.mxu0
    %v911 = vsel %vm137, %v849, 0.0
    %v912 = vsel %vm137, %v869, 0.0
    %v913 = vadd.f32 %v911, %v912
    %v914 = vsel %vm137, %v889, 0.0
    %v915 = vadd.f32 %v913, %v914
    %v916 = vsel %vm137, %v909, 0.0
    %v917 = vadd.f32 %v915, %v916
    %918 = vadd.xlane.f32.xlu0 %v917
    %v919 = vpop.xlane.xlu0 %918
    %v920 = vmul.f32 %v849, %v849
    %v921 = vmul.f32 %v869, %v869
    %v922 = vmul.f32 %v889, %v889
    %v923 = vmul.f32 %v909, %v909
    %v924 = vsel %vm137, %v920, 0.0
    %v925 = vsel %vm137, %v921, 0.0
    %v926 = vadd.f32 %v924, %v925
    %v927 = vsel %vm137, %v922, 0.0
    %v928 = vadd.f32 %v926, %v927
    %v929 = vsel %vm137, %v923, 0.0
    %v930 = vadd.f32 %v928, %v929
    %931 = vadd.xlane.f32.xlu0 %v930
    %v932 = vpop.xlane.xlu0 %931
    %v933 = vmul.f32 %v919, 0.001953125
    %v934 = vmul.f32 %v932, 0.001953125
    %v935 = vmul.f32 %v933, %v933
    %v936 = vsub.f32 %v934, %v935
    %v937 = vmax.f32 %v936, 0.0
    %v938 = vsub.f32 %v849, %v933
    %v939 = vsub.f32 %v869, %v933
    %v940 = vsub.f32 %v889, %v933
    %v941 = vsub.f32 %v909, %v933
    %v942 = vadd.f32 %v937, 1e-05
    %v943 = vrsqrt.pop %v942
    %v944 = vmul.f32 %v943, %v942
    %v945 = vmul.f32 %v944, %v943
    %v946 = vmul.f32 0.5, %v945
    %v947 = vsub.f32 1.5, %v946
    %v948 = vmul.f32 %v943, %v947
    %vm949 = vweird.f32 %v942
    %vm950 = vweird.f32 %v943
    %vm951 = vmor %vm949, %vm950
    %v952 = vsel %vm951, %v943, %v948
    %v953 = vmul.f32 %v938, %v952
    %v954 = vmul.f32 %v939, %v952
    %v955 = vmul.f32 %v940, %v952
    %v956 = vmul.f32 %v941, %v952
    %v957 = vld [vmem:[%s9] sm:$0xf]
    %959 = vset.pattern.permute.xlu0 0
    %960 = vperm.xlu0 %959, %v957
    %v961 = vpop.permute.xlu0 %960
    %v963 = vmul.f32 %v953, %v961
    %v964 = vmul.f32 %v954, %v961
    %v965 = vmul.f32 %v955, %v961
    %v966 = vmul.f32 %v956, %v961
    %v967 = vld [vmem:[%s10] sm:$0xf]
    %969 = vset.pattern.permute.xlu0 0
    %970 = vperm.xlu0 %969, %v967
    %v971 = vpop.permute.xlu0 %970
    %v973 = vadd.f32 %v963, %v971
    %v974 = vadd.f32 %v964, %v971
    %v975 = vadd.f32 %v965, %v971
    %v976 = vadd.f32 %v966, %v971
    %v977 = vmax.f32 %v973, 0.0
    %v978 = vmax.f32 %v974, 0.0
    %v979 = vmax.f32 %v975, 0.0
    %v980 = vmax.f32 %v976, 0.0
    %v985 = vrot.slane %v978, 4
    %v986 = vrot.slane %v980, 4
    %v987 = vsel %vm137, %v977, %v985
    %v988 = vsel %vm137, %v979, %v986
    %991 = vst [vmem:[#allocation2 + $0x4] sm:$0xff] %v987
    %992 = vst [vmem:[#allocation2 + $0xc] sm:$0xff] %v988
    %v993 = vld [vmem:[#allocation2] sm:$0xff]
    %v994 = vld [vmem:[#allocation2 + $0x8] sm:$0xff]
    %v995 = vld [vmem:[#allocation2 + $0x10] sm:$0xf]
    %v996 = vld [vmem:[%s11] ss:$8 sm:$0xf]
    %v998 = vperm.slane %v996, 0
    %v999 = vperm.slane %v996, 1
    %v1000 = vperm.slane %v996, 2
    %v1001 = vperm.slane %v996, 3
    %v1002 = vrot.slane %v999, 4
    %v1003 = vrot.slane %v1001, 4
    %v1004 = vsel %vm137, %v998, %v1002
    %v1005 = vsel %vm137, %v1000, %v1003
    %1006 = vrot.lane.b32.xlu0 %v1004, 111
    %v1007 = vpop.permute.xlu0 %1006
    %1008 = vrot.lane.b32.xlu0 %v1005, 111
    %v1009 = vpop.permute.xlu0 %1008
    %v1010 = vrot.slane %v1007, 4
    %v1011 = vrot.slane %v1009, 4
    %v1012 = vsel %vm250, %v1010, %v1007
    %v1013 = vsel %vm137, %v1010, %v1011
    %v1014 = vsel %vm250, %v1013, %v1009
    %v1018 = vmul.f32 %v993, %v1012
    %v1019 = vmul.f32 %v994, %v1014
    %v1020 = vmul.f32 %v995, %v1011
    %1024 = vst [vmem:[#allocation1] ss:$2 sm:$0xff] %v1018
    %s1025 = scalar_lea.vmem [#allocation1], 16
    %1026 = vst [vmem:[%s1025] ss:$2 sm:$0xff] %v1019
    %s1027 = scalar_lea.vmem [#allocation1], 32
    %1028 = vst [vmem:[%s1027] ss:$2 sm:$0xff] %v1020
    %v1029 = vld.sshfl [vmem:[#allocation1] sm:$0xff pattern:$0x75316420]
    %v1030 = vld.sshfl [vmem:[#allocation1 + $0x8] sm:$0xff pattern:$0x75316420]
    %v1031 = vld.sshfl [vmem:[#allocation1 + $0x10] sm:$0xff pattern:$0x75316420]
    %v1032 = vld.sshfl [vmem:[#allocation1 + $0x18] sm:$0xff pattern:$0x75316420]
    %v1033 = vld.sshfl [vmem:[#allocation1 + $0x20] sm:$0xff pattern:$0x75316420]
    %1034 = vrot.lane.b32.xlu0 %v1029, 17
    %v1035 = vpop.permute.xlu0 %1034
    %1036 = vrot.lane.b32.xlu0 %v1030, 17
    %v1037 = vpop.permute.xlu0 %1036
    %1038 = vrot.lane.b32.xlu0 %v1031, 17
    %v1039 = vpop.permute.xlu0 %1038
    %1040 = vrot.lane.b32.xlu0 %v1032, 17
    %v1041 = vpop.permute.xlu0 %1040
    %1042 = vrot.lane.b32.xlu0 %v1033, 17
    %v1043 = vpop.permute.xlu0 %1042
    %v1044 = vsel %vm283, %v1035, %v1037
    %v1045 = vsel %vm283, %v1037, %v1039
    %v1046 = vsel %vm283, %v1039, %v1041
    %v1047 = vsel %vm283, %v1041, %v1043
    %1052 = vst [vmem:[#allocation3] sm:$0xf] %v1044
    %1053 = vst [vmem:[#allocation3 + $0x8] sm:$0xf] %v1045
    %1054 = vst [vmem:[#allocation3 + $0x10] sm:$0xf] %v1046
    %1055 = vst [vmem:[#allocation3 + $0x18] sm:$0xf] %v1047
    %v1056 = vld [vmem:[#allocation2] sm:$0xff]
    %v1057 = vld [vmem:[#allocation2 + $0x8] sm:$0xff]
    %v1058 = vld [vmem:[#allocation2 + $0x10] sm:$0xf]
    %v1059 = vld [vmem:[%s299] ss:$8 sm:$0xf]
    %v1061 = vperm.slane %v1059, 0
    %v1062 = vperm.slane %v1059, 1
    %v1063 = vperm.slane %v1059, 2
    %v1064 = vperm.slane %v1059, 3
    %v1065 = vrot.slane %v1062, 4
    %v1066 = vrot.slane %v1064, 4
    %v1067 = vsel %vm137, %v1061, %v1065
    %v1068 = vsel %vm137, %v1063, %v1066
    %1069 = vrot.lane.b32.xlu0 %v1067, 112
    %v1070 = vpop.permute.xlu0 %1069
    %1071 = vrot.lane.b32.xlu0 %v1068, 112
    %v1072 = vpop.permute.xlu0 %1071
    %v1073 = vrot.slane %v1070, 4
    %v1074 = vrot.slane %v1072, 4
    %v1075 = vsel %vm316, %v1073, %v1070
    %v1076 = vsel %vm137, %v1073, %v1074
    %v1077 = vsel %vm316, %v1076, %v1072
    %v1081 = vmul.f32 %v1056, %v1075
    %v1082 = vmul.f32 %v1057, %v1077
    %v1083 = vmul.f32 %v1058, %v1074
    %1087 = vst [vmem:[#allocation1] ss:$2 sm:$0xff] %v1081
    %s1088 = scalar_lea.vmem [#allocation1], 16
    %1089 = vst [vmem:[%s1088] ss:$2 sm:$0xff] %v1082
    %s1090 = scalar_lea.vmem [#allocation1], 32
    %1091 = vst [vmem:[%s1090] ss:$2 sm:$0xff] %v1083
    %v1092 = vld.sshfl [vmem:[#allocation1] sm:$0xff pattern:$0x75316420]
    %v1093 = vld.sshfl [vmem:[#allocation1 + $0x8] sm:$0xff pattern:$0x75316420]
    %v1094 = vld.sshfl [vmem:[#allocation1 + $0x10] sm:$0xff pattern:$0x75316420]
    %v1095 = vld.sshfl [vmem:[#allocation1 + $0x18] sm:$0xff pattern:$0x75316420]
    %v1096 = vld.sshfl [vmem:[#allocation1 + $0x20] sm:$0xff pattern:$0x75316420]
    %1097 = vrot.lane.b32.xlu0 %v1092, 16
    %v1098 = vpop.permute.xlu0 %1097
    %1099 = vrot.lane.b32.xlu0 %v1093, 16
    %v1100 = vpop.permute.xlu0 %1099
    %1101 = vrot.lane.b32.xlu0 %v1094, 16
    %v1102 = vpop.permute.xlu0 %1101
    %1103 = vrot.lane.b32.xlu0 %v1095, 16
    %v1104 = vpop.permute.xlu0 %1103
    %1105 = vrot.lane.b32.xlu0 %v1096, 16
    %v1106 = vpop.permute.xlu0 %1105
    %v1107 = vsel %vm349, %v1098, %v1100
    %v1108 = vsel %vm349, %v1100, %v1102
    %v1109 = vsel %vm349, %v1102, %v1104
    %v1110 = vsel %vm349, %v1104, %v1106
    %1115 = vst [vmem:[#allocation3 + $0x20] sm:$0xf] %v1107
    %1116 = vst [vmem:[#allocation3 + $0x28] sm:$0xf] %v1108
    %1117 = vst [vmem:[#allocation3 + $0x30] sm:$0xf] %v1109
    %1118 = vst [vmem:[#allocation3 + $0x38] sm:$0xf] %v1110
    %v1119 = vld [vmem:[#allocation2] sm:$0xff]
    %v1120 = vld [vmem:[#allocation2 + $0x8] sm:$0xff]
    %v1121 = vld [vmem:[#allocation2 + $0x10] sm:$0xf]
    %v1122 = vld [vmem:[%s365] ss:$8 sm:$0xf]
    %v1124 = vperm.slane %v1122, 0
    %v1125 = vperm.slane %v1122, 1
    %v1126 = vperm.slane %v1122, 2
    %v1127 = vperm.slane %v1122, 3
    %v1128 = vrot.slane %v1125, 4
    %v1129 = vrot.slane %v1127, 4
    %v1130 = vsel %vm137, %v1124, %v1128
    %v1131 = vsel %vm137, %v1126, %v1129
    %1132 = vrot.lane.b32.xlu0 %v1130, 113
    %v1133 = vpop.permute.xlu0 %1132
    %1134 = vrot.lane.b32.xlu0 %v1131, 113
    %v1135 = vpop.permute.xlu0 %1134
    %v1136 = vrot.slane %v1133, 4
    %v1137 = vrot.slane %v1135, 4
    %v1138 = vsel %vm382, %v1136, %v1133
    %v1139 = vsel %vm137, %v1136, %v1137
    %v1140 = vsel %vm382, %v1139, %v1135
    %v1144 = vmul.f32 %v1119, %v1138
    %v1145 = vmul.f32 %v1120, %v1140
    %v1146 = vmul.f32 %v1121, %v1137
    %1150 = vst [vmem:[#allocation1] ss:$2 sm:$0xff] %v1144
    %s1151 = scalar_lea.vmem [#allocation1], 16
    %1152 = vst [vmem:[%s1151] ss:$2 sm:$0xff] %v1145
    %s1153 = scalar_lea.vmem [#allocation1], 32
    %1154 = vst [vmem:[%s1153] ss:$2 sm:$0xff] %v1146
    %v1155 = vld.sshfl [vmem:[#allocation1] sm:$0xff pattern:$0x75316420]
    %v1156 = vld.sshfl [vmem:[#allocation1 + $0x8] sm:$0xff pattern:$0x75316420]
    %v1157 = vld.sshfl [vmem:[#allocation1 + $0x10] sm:$0xff pattern:$0x75316420]
    %v1158 = vld.sshfl [vmem:[#allocation1 + $0x18] sm:$0xff pattern:$0x75316420]
    %v1159 = vld.sshfl [vmem:[#allocation1 + $0x20] sm:$0xff pattern:$0x75316420]
    %1160 = vrot.lane.b32.xlu0 %v1155, 15
    %v1161 = vpop.permute.xlu0 %1160
    %1162 = vrot.lane.b32.xlu0 %v1156, 15
    %v1163 = vpop.permute.xlu0 %1162
    %1164 = vrot.lane.b32.xlu0 %v1157, 15
    %v1165 = vpop.permute.xlu0 %1164
    %1166 = vrot.lane.b32.xlu0 %v1158, 15
    %v1167 = vpop.permute.xlu0 %1166
    %1168 = vrot.lane.b32.xlu0 %v1159, 15
    %v1169 = vpop.permute.xlu0 %1168
    %v1170 = vsel %vm415, %v1161, %v1163
    %v1171 = vsel %vm415, %v1163, %v1165
    %v1172 = vsel %vm415, %v1165, %v1167
    %v1173 = vsel %vm415, %v1167, %v1169
    %1178 = vst [vmem:[#allocation3 + $0x40] sm:$0xf] %v1170
    %1179 = vst [vmem:[#allocation3 + $0x48] sm:$0xf] %v1171
    %1180 = vst [vmem:[#allocation3 + $0x50] sm:$0xf] %v1172
    %1181 = vst [vmem:[#allocation3 + $0x58] sm:$0xf] %v1173
    %v1182 = vld [vmem:[#allocation2] sm:$0xff]
    %v1183 = vld [vmem:[#allocation2 + $0x8] sm:$0xff]
    %v1184 = vld [vmem:[#allocation2 + $0x10] sm:$0xf]
    %v1185 = vld [vmem:[%s431] ss:$8 sm:$0xf]
    %v1187 = vperm.slane %v1185, 0
    %v1188 = vperm.slane %v1185, 1
    %v1189 = vperm.slane %v1185, 2
    %v1190 = vperm.slane %v1185, 3
    %v1191 = vrot.slane %v1188, 4
    %v1192 = vrot.slane %v1190, 4
    %v1193 = vsel %vm137, %v1187, %v1191
    %v1194 = vsel %vm137, %v1189, %v1192
    %1195 = vrot.lane.b32.xlu0 %v1193, 127
    %v1196 = vpop.permute.xlu0 %1195
    %1197 = vrot.lane.b32.xlu0 %v1194, 127
    %v1198 = vpop.permute.xlu0 %1197
    %v1199 = vrot.slane %v1196, 4
    %v1200 = vrot.slane %v1198, 4
    %v1201 = vsel %vm448, %v1199, %v1196
    %v1202 = vsel %vm137, %v1199, %v1200
    %v1203 = vsel %vm448, %v1202, %v1198
    %v1207 = vmul.f32 %v1182, %v1201
    %v1208 = vmul.f32 %v1183, %v1203
    %v1209 = vmul.f32 %v1184, %v1200
    %1213 = vst [vmem:[#allocation1] ss:$2 sm:$0xff] %v1207
    %s1214 = scalar_lea.vmem [#allocation1], 16
    %1215 = vst [vmem:[%s1214] ss:$2 sm:$0xff] %v1208
    %s1216 = scalar_lea.vmem [#allocation1], 32
    %1217 = vst [vmem:[%s1216] ss:$2 sm:$0xff] %v1209
    %v1218 = vld.sshfl [vmem:[#allocation1] sm:$0xff pattern:$0x75316420]
    %v1219 = vld.sshfl [vmem:[#allocation1 + $0x8] sm:$0xff pattern:$0x75316420]
    %v1220 = vld.sshfl [vmem:[#allocation1 + $0x10] sm:$0xff pattern:$0x75316420]
    %v1221 = vld.sshfl [vmem:[#allocation1 + $0x18] sm:$0xff pattern:$0x75316420]
    %v1222 = vld.sshfl [vmem:[#allocation1 + $0x20] sm:$0xff pattern:$0x75316420]
    %1223 = vrot.lane.b32.xlu0 %v1218, 1
    %v1224 = vpop.permute.xlu0 %1223
    %1225 = vrot.lane.b32.xlu0 %v1219, 1
    %v1226 = vpop.permute.xlu0 %1225
    %1227 = vrot.lane.b32.xlu0 %v1220, 1
    %v1228 = vpop.permute.xlu0 %1227
    %1229 = vrot.lane.b32.xlu0 %v1221, 1
    %v1230 = vpop.permute.xlu0 %1229
    %1231 = vrot.lane.b32.xlu0 %v1222, 1
    %v1232 = vpop.permute.xlu0 %1231
    %v1233 = vsel %vm481, %v1224, %v1226
    %v1234 = vsel %vm481, %v1226, %v1228
    %v1235 = vsel %vm481, %v1228, %v1230
    %v1236 = vsel %vm481, %v1230, %v1232
    %1241 = vst [vmem:[#allocation3 + $0x60] sm:$0xf] %v1233
    %1242 = vst [vmem:[#allocation3 + $0x68] sm:$0xf] %v1234
    %1243 = vst [vmem:[#allocation3 + $0x70] sm:$0xf] %v1235
    %1244 = vst [vmem:[#allocation3 + $0x78] sm:$0xf] %v1236
    %v1245 = vld [vmem:[#allocation2 + $0x4] sm:$0xff]
    %v1246 = vld [vmem:[#allocation2 + $0xc] sm:$0xff]
    %v1247 = vld [vmem:[%s496] ss:$8 sm:$0xf]
    %v1249 = vperm.slane %v1247, 0
    %v1250 = vperm.slane %v1247, 1
    %v1251 = vperm.slane %v1247, 2
    %v1252 = vperm.slane %v1247, 3
    %v1253 = vrot.slane %v1250, 4
    %v1254 = vrot.slane %v1252, 4
    %v1255 = vsel %vm137, %v1249, %v1253
    %v1256 = vsel %vm137, %v1251, %v1254
    %v1259 = vmul.f32 %v1245, %v1255
    %v1260 = vmul.f32 %v1246, %v1256
    %1263 = vst [vmem:[#allocation1] ss:$2 sm:$0xff] %v1259
    %s1264 = scalar_lea.vmem [#allocation1], 16
    %1265 = vst [vmem:[%s1264] ss:$2 sm:$0xff] %v1260
    %v1266 = vld.sshfl [vmem:[#allocation1] sm:$0xff pattern:$0x75316420]
    %v1267 = vld.sshfl [vmem:[#allocation1 + $0x8] sm:$0xff pattern:$0x75316420]
    %v1268 = vld.sshfl [vmem:[#allocation1 + $0x10] sm:$0xff pattern:$0x75316420]
    %v1269 = vld.sshfl [vmem:[#allocation1 + $0x18] sm:$0xff pattern:$0x75316420]
    %1274 = vst [vmem:[#allocation3 + $0x80] sm:$0xf] %v1266
    %1275 = vst [vmem:[#allocation3 + $0x88] sm:$0xf] %v1267
    %1276 = vst [vmem:[#allocation3 + $0x90] sm:$0xf] %v1268
    %1277 = vst [vmem:[#allocation3 + $0x98] sm:$0xf] %v1269
    %v1278 = vld [vmem:[#allocation2 + $0x4] sm:$0xff]
    %v1279 = vld [vmem:[#allocation2 + $0xc] sm:$0xff]
    %v1280 = vld [vmem:[#allocation2 + $0x14] sm:$0xf]
    %v1281 = vld [vmem:[%s531] ss:$8 sm:$0xf]
    %v1283 = vperm.slane %v1281, 0
    %v1284 = vperm.slane %v1281, 1
    %v1285 = vperm.slane %v1281, 2
    %v1286 = vperm.slane %v1281, 3
    %v1287 = vrot.slane %v1284, 4
    %v1288 = vrot.slane %v1286, 4
    %v1289 = vsel %vm137, %v1283, %v1287
    %v1290 = vsel %vm137, %v1285, %v1288
    %1291 = vrot.lane.b32.xlu0 %v1289, 1
    %v1292 = vpop.permute.xlu0 %1291
    %1293 = vrot.lane.b32.xlu0 %v1290, 1
    %v1294 = vpop.permute.xlu0 %1293
    %v1295 = vrot.slane %v1292, 4
    %v1296 = vrot.slane %v1294, 4
    %v1297 = vsel %vm481, %v1295, %v1292
    %v1298 = vsel %vm137, %v1295, %v1296
    %v1299 = vsel %vm481, %v1298, %v1294
    %v1303 = vmul.f32 %v1278, %v1297
    %v1304 = vmul.f32 %v1279, %v1299
    %v1305 = vmul.f32 %v1280, %v1296
    %1309 = vst [vmem:[#allocation1] ss:$2 sm:$0xff] %v1303
    %s1310 = scalar_lea.vmem [#allocation1], 16
    %1311 = vst [vmem:[%s1310] ss:$2 sm:$0xff] %v1304
    %s1312 = scalar_lea.vmem [#allocation1], 32
    %1313 = vst [vmem:[%s1312] ss:$2 sm:$0xff] %v1305
    %v1314 = vld.sshfl [vmem:[#allocation1] sm:$0xff pattern:$0x75316420]
    %v1315 = vld.sshfl [vmem:[#allocation1 + $0x8] sm:$0xff pattern:$0x75316420]
    %v1316 = vld.sshfl [vmem:[#allocation1 + $0x10] sm:$0xff pattern:$0x75316420]
    %v1317 = vld.sshfl [vmem:[#allocation1 + $0x18] sm:$0xff pattern:$0x75316420]
    %v1318 = vld.sshfl [vmem:[#allocation1 + $0x20] sm:$0xff pattern:$0x75316420]
    %1319 = vrot.lane.b32.xlu0 %v1314, 127
    %v1320 = vpop.permute.xlu0 %1319
    %1321 = vrot.lane.b32.xlu0 %v1315, 127
    %v1322 = vpop.permute.xlu0 %1321
    %1323 = vrot.lane.b32.xlu0 %v1316, 127
    %v1324 = vpop.permute.xlu0 %1323
    %1325 = vrot.lane.b32.xlu0 %v1317, 127
    %v1326 = vpop.permute.xlu0 %1325
    %1327 = vrot.lane.b32.xlu0 %v1318, 127
    %v1328 = vpop.permute.xlu0 %1327
    %v1329 = vsel %vm448, %v1320, %v1322
    %v1330 = vsel %vm448, %v1322, %v1324
    %v1331 = vsel %vm448, %v1324, %v1326
    %v1332 = vsel %vm448, %v1326, %v1328
    %1337 = vst [vmem:[#allocation3 + $0xa0] sm:$0xf] %v1329
    %1338 = vst [vmem:[#allocation3 + $0xa8] sm:$0xf] %v1330
    %1339 = vst [vmem:[#allocation3 + $0xb0] sm:$0xf] %v1331
    %1340 = vst [vmem:[#allocation3 + $0xb8] sm:$0xf] %v1332
    %v1341 = vld [vmem:[#allocation2 + $0x4] sm:$0xff]
    %v1342 = vld [vmem:[#allocation2 + $0xc] sm:$0xff]
    %v1343 = vld [vmem:[#allocation2 + $0x14] sm:$0xf]
    %v1344 = vld [vmem:[%s595] ss:$8 sm:$0xf]
    %v1346 = vperm.slane %v1344, 0
    %v1347 = vperm.slane %v1344, 1
    %v1348 = vperm.slane %v1344, 2
    %v1349 = vperm.slane %v1344, 3
    %v1350 = vrot.slane %v1347, 4
    %v1351 = vrot.slane %v1349, 4
    %v1352 = vsel %vm137, %v1346, %v1350
    %v1353 = vsel %vm137, %v1348, %v1351
    %1354 = vrot.lane.b32.xlu0 %v1352, 15
    %v1355 = vpop.permute.xlu0 %1354
    %1356 = vrot.lane.b32.xlu0 %v1353, 15
    %v1357 = vpop.permute.xlu0 %1356
    %v1358 = vrot.slane %v1355, 4
    %v1359 = vrot.slane %v1357, 4
    %v1360 = vsel %vm415, %v1358, %v1355
    %v1361 = vsel %vm137, %v1358, %v1359
    %v1362 = vsel %vm415, %v1361, %v1357
    %v1366 = vmul.f32 %v1341, %v1360
    %v1367 = vmul.f32 %v1342, %v1362
    %v1368 = vmul.f32 %v1343, %v1359
    %1372 = vst [vmem:[#allocation1] ss:$2 sm:$0xff] %v1366
    %s1373 = scalar_lea.vmem [#allocation1], 16
    %1374 = vst [vmem:[%s1373] ss:$2 sm:$0xff] %v1367
    %s1375 = scalar_lea.vmem [#allocation1], 32
    %1376 = vst [vmem:[%s1375] ss:$2 sm:$0xff] %v1368
    %v1377 = vld.sshfl [vmem:[#allocation1] sm:$0xff pattern:$0x75316420]
    %v1378 = vld.sshfl [vmem:[#allocation1 + $0x8] sm:$0xff pattern:$0x75316420]
    %v1379 = vld.sshfl [vmem:[#allocation1 + $0x10] sm:$0xff pattern:$0x75316420]
    %v1380 = vld.sshfl [vmem:[#allocation1 + $0x18] sm:$0xff pattern:$0x75316420]
    %v1381 = vld.sshfl [vmem:[#allocation1 + $0x20] sm:$0xff pattern:$0x75316420]
    %1382 = vrot.lane.b32.xlu0 %v1377, 113
    %v1383 = vpop.permute.xlu0 %1382
    %1384 = vrot.lane.b32.xlu0 %v1378, 113
    %v1385 = vpop.permute.xlu0 %1384
    %1386 = vrot.lane.b32.xlu0 %v1379, 113
    %v1387 = vpop.permute.xlu0 %1386
    %1388 = vrot.lane.b32.xlu0 %v1380, 113
    %v1389 = vpop.permute.xlu0 %1388
    %1390 = vrot.lane.b32.xlu0 %v1381, 113
    %v1391 = vpop.permute.xlu0 %1390
    %v1392 = vsel %vm382, %v1383, %v1385
    %v1393 = vsel %vm382, %v1385, %v1387
    %v1394 = vsel %vm382, %v1387, %v1389
    %v1395 = vsel %vm382, %v1389, %v1391
    %1400 = vst [vmem:[#allocation3 + $0xc0] sm:$0xf] %v1392
    %1401 = vst [vmem:[#allocation3 + $0xc8] sm:$0xf] %v1393
    %1402 = vst [vmem:[#allocation3 + $0xd0] sm:$0xf] %v1394
    %1403 = vst [vmem:[#allocation3 + $0xd8] sm:$0xf] %v1395
    %v1404 = vld [vmem:[#allocation2 + $0x4] sm:$0xff]
    %v1405 = vld [vmem:[#allocation2 + $0xc] sm:$0xff]
    %v1406 = vld [vmem:[#allocation2 + $0x14] sm:$0xf]
    %v1407 = vld [vmem:[%s659] ss:$8 sm:$0xf]
    %v1409 = vperm.slane %v1407, 0
    %v1410 = vperm.slane %v1407, 1
    %v1411 = vperm.slane %v1407, 2
    %v1412 = vperm.slane %v1407, 3
    %v1413 = vrot.slane %v1410, 4
    %v1414 = vrot.slane %v1412, 4
    %v1415 = vsel %vm137, %v1409, %v1413
    %v1416 = vsel %vm137, %v1411, %v1414
    %1417 = vrot.lane.b32.xlu0 %v1415, 16
    %v1418 = vpop.permute.xlu0 %1417
    %1419 = vrot.lane.b32.xlu0 %v1416, 16
    %v1420 = vpop.permute.xlu0 %1419
    %v1421 = vrot.slane %v1418, 4
    %v1422 = vrot.slane %v1420, 4
    %v1423 = vsel %vm349, %v1421, %v1418
    %v1424 = vsel %vm137, %v1421, %v1422
    %v1425 = vsel %vm349, %v1424, %v1420
    %v1429 = vmul.f32 %v1404, %v1423
    %v1430 = vmul.f32 %v1405, %v1425
    %v1431 = vmul.f32 %v1406, %v1422
    %1435 = vst [vmem:[#allocation1] ss:$2 sm:$0xff] %v1429
    %s1436 = scalar_lea.vmem [#allocation1], 16
    %1437 = vst [vmem:[%s1436] ss:$2 sm:$0xff] %v1430
    %s1438 = scalar_lea.vmem [#allocation1], 32
    %1439 = vst [vmem:[%s1438] ss:$2 sm:$0xff] %v1431
    %v1440 = vld.sshfl [vmem:[#allocation1] sm:$0xff pattern:$0x75316420]
    %v1441 = vld.sshfl [vmem:[#allocation1 + $0x8] sm:$0xff pattern:$0x75316420]
    %v1442 = vld.sshfl [vmem:[#allocation1 + $0x10] sm:$0xff pattern:$0x75316420]
    %v1443 = vld.sshfl [vmem:[#allocation1 + $0x18] sm:$0xff pattern:$0x75316420]
    %v1444 = vld.sshfl [vmem:[#allocation1 + $0x20] sm:$0xff pattern:$0x75316420]
    %1445 = vrot.lane.b32.xlu0 %v1440, 112
    %v1446 = vpop.permute.xlu0 %1445
    %1447 = vrot.lane.b32.xlu0 %v1441, 112
    %v1448 = vpop.permute.xlu0 %1447
    %1449 = vrot.lane.b32.xlu0 %v1442, 112
    %v1450 = vpop.permute.xlu0 %1449
    %1451 = vrot.lane.b32.xlu0 %v1443, 112
    %v1452 = vpop.permute.xlu0 %1451
    %1453 = vrot.lane.b32.xlu0 %v1444, 112
    %v1454 = vpop.permute.xlu0 %1453
    %v1455 = vsel %vm316, %v1446, %v1448
    %v1456 = vsel %vm316, %v1448, %v1450
    %v1457 = vsel %vm316, %v1450, %v1452
    %v1458 = vsel %vm316, %v1452, %v1454
    %1463 = vst [vmem:[#allocation3 + $0xe0] sm:$0xf] %v1455
    %1464 = vst [vmem:[#allocation3 + $0xe8] sm:$0xf] %v1456
    %1465 = vst [vmem:[#allocation3 + $0xf0] sm:$0xf] %v1457
    %1466 = vst [vmem:[#allocation3 + $0xf8] sm:$0xf] %v1458
    %v1467 = vld [vmem:[#allocation2 + $0x4] sm:$0xff]
    %v1468 = vld [vmem:[#allocation2 + $0xc] sm:$0xff]
    %v1469 = vld [vmem:[#allocation2 + $0x14] sm:$0xf]
    %v1470 = vld [vmem:[%s723] ss:$8 sm:$0xf]
    %v1472 = vperm.slane %v1470, 0
    %v1473 = vperm.slane %v1470, 1
    %v1474 = vperm.slane %v1470, 2
    %v1475 = vperm.slane %v1470, 3
    %v1476 = vrot.slane %v1473, 4
    %v1477 = vrot.slane %v1475, 4
    %v1478 = vsel %vm137, %v1472, %v1476
    %v1479 = vsel %vm137, %v1474, %v1477
    %1480 = vrot.lane.b32.xlu0 %v1478, 17
    %v1481 = vpop.permute.xlu0 %1480
    %1482 = vrot.lane.b32.xlu0 %v1479, 17
    %v1483 = vpop.permute.xlu0 %1482
    %v1484 = vrot.slane %v1481, 4
    %v1485 = vrot.slane %v1483, 4
    %v1486 = vsel %vm283, %v1484, %v1481
    %v1487 = vsel %vm137, %v1484, %v1485
    %v1488 = vsel %vm283, %v1487, %v1483
    %v1492 = vmul.f32 %v1467, %v1486
    %v1493 = vmul.f32 %v1468, %v1488
    %v1494 = vmul.f32 %v1469, %v1485
    %1498 = vst [vmem:[#allocation1] ss:$2 sm:$0xff] %v1492
    %s1499 = scalar_lea.vmem [#allocation1], 16
    %1500 = vst [vmem:[%s1499] ss:$2 sm:$0xff] %v1493
    %s1501 = scalar_lea.vmem [#allocation1], 32
    %1502 = vst [vmem:[%s1501] ss:$2 sm:$0xff] %v1494
    %v1503 = vld.sshfl [vmem:[#allocation1] sm:$0xff pattern:$0x75316420]
    %v1504 = vld.sshfl [vmem:[#allocation1 + $0x8] sm:$0xff pattern:$0x75316420]
    %v1505 = vld.sshfl [vmem:[#allocation1 + $0x10] sm:$0xff pattern:$0x75316420]
    %v1506 = vld.sshfl [vmem:[#allocation1 + $0x18] sm:$0xff pattern:$0x75316420]
    %v1507 = vld.sshfl [vmem:[#allocation1 + $0x20] sm:$0xff pattern:$0x75316420]
    %1508 = vrot.lane.b32.xlu0 %v1503, 111
    %v1509 = vpop.permute.xlu0 %1508
    %1510 = vrot.lane.b32.xlu0 %v1504, 111
    %v1511 = vpop.permute.xlu0 %1510
    %1512 = vrot.lane.b32.xlu0 %v1505, 111
    %v1513 = vpop.permute.xlu0 %1512
    %1514 = vrot.lane.b32.xlu0 %v1506, 111
    %v1515 = vpop.permute.xlu0 %1514
    %1516 = vrot.lane.b32.xlu0 %v1507, 111
    %v1517 = vpop.permute.xlu0 %1516
    %v1518 = vsel %vm250, %v1509, %v1511
    %v1519 = vsel %vm250, %v1511, %v1513
    %v1520 = vsel %vm250, %v1513, %v1515
    %v1521 = vsel %vm250, %v1515, %v1517
    %1526 = vst [vmem:[#allocation3 + $0x100] sm:$0xf] %v1518
    %1527 = vst [vmem:[#allocation3 + $0x108] sm:$0xf] %v1519
    %1528 = vst [vmem:[#allocation3 + $0x110] sm:$0xf] %v1520
    %1529 = vst [vmem:[#allocation3 + $0x118] sm:$0xf] %v1521
    %v1530 = vld [vmem:[#allocation9] sm:$0xff]
    %v1531 = vld [vmem:[#allocation3] sm:$0xff]
    %v1532 = vld [vmem:[#allocation3 + $0x8] sm:$0xff]
    %v1533 = vld [vmem:[#allocation3 + $0x10] sm:$0xff]
    %v1534 = vld [vmem:[#allocation3 + $0x18] sm:$0xff]
    %v1535 = vld [vmem:[#allocation3 + $0x20] sm:$0xff]
    %v1536 = vld [vmem:[#allocation3 + $0x28] sm:$0xff]
    %v1537 = vld [vmem:[#allocation3 + $0x30] sm:$0xff]
    %v1538 = vld [vmem:[#allocation3 + $0x38] sm:$0xff]
    %v1539 = vld [vmem:[#allocation3 + $0x40] sm:$0xff]
    %v1540 = vld [vmem:[#allocation3 + $0x48] sm:$0xff]
    %v1541 = vld [vmem:[#allocation3 + $0x50] sm:$0xff]
    %v1542 = vld [vmem:[#allocation3 + $0x58] sm:$0xff]
    %v1543 = vld [vmem:[#allocation3 + $0x60] sm:$0xff]
    %v1544 = vld [vmem:[#allocation3 + $0x68] sm:$0xff]
    %v1545 = vld [vmem:[#allocation3 + $0x70] sm:$0xff]
    %v1546 = vld [vmem:[#allocation3 + $0x78] sm:$0xff]
    %v1547 = vld [vmem:[#allocation3 + $0x80] sm:$0xff]
    %v1548 = vld [vmem:[#allocation3 + $0x88] sm:$0xff]
    %v1549 = vld [vmem:[#allocation3 + $0x90] sm:$0xff]
    %v1550 = vld [vmem:[#allocation3 + $0x98] sm:$0xff]
    %v1551 = vld [vmem:[#allocation3 + $0xa0] sm:$0xff]
    %v1552 = vld [vmem:[#allocation3 + $0xa8] sm:$0xff]
    %v1553 = vld [vmem:[#allocation3 + $0xb0] sm:$0xff]
    %v1554 = vld [vmem:[#allocation3 + $0xb8] sm:$0xff]
    %v1555 = vld [vmem:[#allocation3 + $0xc0] sm:$0xff]
    %v1556 = vld [vmem:[#allocation3 + $0xc8] sm:$0xff]
    %v1557 = vld [vmem:[#allocation3 + $0xd0] sm:$0xff]
    %v1558 = vld [vmem:[#allocation3 + $0xd8] sm:$0xff]
    %v1559 = vld [vmem:[#allocation3 + $0xe0] sm:$0xff]
    %v1560 = vld [vmem:[#allocation3 + $0xe8] sm:$0xff]
    %v1561 = vld [vmem:[#allocation3 + $0xf0] sm:$0xff]
    %v1562 = vld [vmem:[#allocation3 + $0xf8] sm:$0xff]
    %v1563 = vld [vmem:[#allocation3 + $0x100] sm:$0xff]
    %v1564 = vld [vmem:[#allocation3 + $0x108] sm:$0xff]
    %v1565 = vld [vmem:[#allocation3 + $0x110] sm:$0xff]
    %v1566 = vld [vmem:[#allocation3 + $0x118] sm:$0xff]
    %v1567 = vld [vmem:[%s4] sm:$0xff]
    %1569 = vset.pattern.permute.xlu0 0
    %1570 = vperm.xlu0 %1569, %v1567
    %v1571 = vpop.permute.xlu0 %1570
    %v1574 = vsel %vm827, %v1530, 0
    %1576 = vmatpush.msra.mxu0 0.0
    %1577 = vmatpush.msra.mxu0 0.0
    %1578 = vmatpush.msra.mxu0 0.0
    %1579 = vmatpush.msra.mxu0 0.0
    %1580 = vmatpush.msra.mxu0 0.0
    %1581 = vmatpush.msra.mxu0 0.0
    %1582 = vmatpush.msra.mxu0 0.0
    %1583 = vmatpush.msra.mxu0 %v1563
    %1584 = vmatpush.msra.mxu0 %v1559
    %1585 = vmatpush.msra.mxu0 %v1555
    %1586 = vmatpush.msra.mxu0 %v1551
    %1587 = vmatpush.msra.mxu0 %v1547
    %1588 = vmatpush.msra.mxu0 %v1543
    %1589 = vmatpush.msra.mxu0 %v1539
    %1590 = vmatpush.msra.mxu0 %v1535
    %1591 = vmatpush.msra.mxu0 %v1531
    %1592 = vmatmul.f32.gmra.mxu0 %v1574
    %v1593 = vpop.f32.mrf.mxu0
    %v1594 = vadd.f32 %v1571, %v1593
    %1595 = vdwg.mxu0
    %1596 = vmatpush.msra.mxu0 0.0
    %1597 = vmatpush.msra.mxu0 0.0
    %1598 = vmatpush.msra.mxu0 0.0
    %1599 = vmatpush.msra.mxu0 0.0
    %1600 = vmatpush.msra.mxu0 0.0
    %1601 = vmatpush.msra.mxu0 0.0
    %1602 = vmatpush.msra.mxu0 0.0
    %1603 = vmatpush.msra.mxu0 %v1564
    %1604 = vmatpush.msra.mxu0 %v1560
    %1605 = vmatpush.msra.mxu0 %v1556
    %1606 = vmatpush.msra.mxu0 %v1552
    %1607 = vmatpush.msra.mxu0 %v1548
    %1608 = vmatpush.msra.mxu0 %v1544
    %1609 = vmatpush.msra.mxu0 %v1540
    %1610 = vmatpush.msra.mxu0 %v1536
    %1611 = vmatpush.msra.mxu0 %v1532
    %1612 = vmatmul.f32.gmra.mxu0 %v1574
    %v1613 = vpop.f32.mrf.mxu0
    %v1614 = vadd.f32 %v1571, %v1613
    %1615 = vdwg.mxu0
    %1616 = vmatpush.msra.mxu0 0.0
    %1617 = vmatpush.msra.mxu0 0.0
    %1618 = vmatpush.msra.mxu0 0.0
    %1619 = vmatpush.msra.mxu0 0.0
    %1620 = vmatpush.msra.mxu0 0.0
    %1621 = vmatpush.msra.mxu0 0.0
    %1622 = vmatpush.msra.mxu0 0.0
    %1623 = vmatpush.msra.mxu0 %v1565
    %1624 = vmatpush.msra.mxu0 %v1561
    %1625 = vmatpush.msra.mxu0 %v1557
    %1626 = vmatpush.msra.mxu0 %v1553
    %1627 = vmatpush.msra.mxu0 %v1549
    %1628 = vmatpush.msra.mxu0 %v1545
    %1629 = vmatpush.msra.mxu0 %v1541
    %1630 = vmatpush.msra.mxu0 %v1537
    %1631 = vmatpush.msra.mxu0 %v1533
    %1632 = vmatmul.f32.gmra.mxu0 %v1574
    %v1633 = vpop.f32.mrf.mxu0
    %v1634 = vadd.f32 %v1571, %v1633
    %1635 = vdwg.mxu0
    %1636 = vmatpush.msra.mxu0 0.0
    %1637 = vmatpush.msra.mxu0 0.0
    %1638 = vmatpush.msra.mxu0 0.0
    %1639 = vmatpush.msra.mxu0 0.0
    %1640 = vmatpush.msra.mxu0 0.0
    %1641 = vmatpush.msra.mxu0 0.0
    %1642 = vmatpush.msra.mxu0 0.0
    %1643 = vmatpush.msra.mxu0 %v1566
    %1644 = vmatpush.msra.mxu0 %v1562
    %1645 = vmatpush.msra.mxu0 %v1558
    %1646 = vmatpush.msra.mxu0 %v1554
    %1647 = vmatpush.msra.mxu0 %v1550
    %1648 = vmatpush.msra.mxu0 %v1546
    %1649 = vmatpush.msra.mxu0 %v1542
    %1650 = vmatpush.msra.mxu0 %v1538
    %1651 = vmatpush.msra.mxu0 %v1534
    %1652 = vmatmul.f32.gmra.mxu0 %v1574
    %v1653 = vpop.f32.mrf.mxu0
    %v1654 = vadd.f32 %v1571, %v1653
    %1655 = vdwg.mxu0
    %v1656 = vld [vmem:[%s5] sm:$0xff]
    %v1657 = vld [vmem:[%s6] sm:$0xff]
    %1659 = vset.pattern.permute.xlu0 0
    %1660 = vperm.xlu0 %1659, %v1657
    %v1661 = vpop.permute.xlu0 %1660
    %1663 = vst [vmem:[#allocation1] ss:$2 sm:$0xff] %v122
    %s1664 = scalar_lea.vmem [#allocation1], 16
    %1665 = vst [vmem:[%s1664] ss:$2 sm:$0xff] %v123
    %v1666 = vld.sshfl [vmem:[#allocation1] sm:$0xff pattern:$0x75316420]
    %v1667 = vld.sshfl [vmem:[#allocation1 + $0x8] sm:$0xff pattern:$0x75316420]
    %v1668 = vld.sshfl [vmem:[#allocation1 + $0x10] sm:$0xff pattern:$0x75316420]
    %v1669 = vld.sshfl [vmem:[#allocation1 + $0x18] sm:$0xff pattern:$0x75316420]
    %vm1670 = vcmask 31744
    %v1672 = vsel %vm1670, %v1656, 0
    %v1674 = vsel %vm137, %v1666, 0
    %v1676 = vsel %vm137, %v1667, 0
    %v1678 = vsel %vm137, %v1668, 0
    %v1680 = vsel %vm137, %v1669, 0
    %1682 = vmatpush.msra.mxu0 0.0
    %1683 = vmatpush.msra.mxu0 0.0
    %1684 = vmatpush.msra.mxu0 0.0
    %1685 = vmatpush.msra.mxu0 0.0
    %1686 = vmatpush.msra.mxu0 0.0
    %1687 = vmatpush.msra.mxu0 0.0
    %1688 = vmatpush.msra.mxu0 0.0
    %1689 = vmatpush.msra.mxu0 0.0
    %1690 = vmatpush.msra.mxu0 0.0
    %1691 = vmatpush.msra.mxu0 0.0
    %1692 = vmatpush.msra.mxu0 0.0
    %1693 = vmatpush.msra.mxu0 0.0
    %1694 = vmatpush.msra.mxu0 0.0
    %1695 = vmatpush.msra.mxu0 0.0
    %1696 = vmatpush.msra.mxu0 0.0
    %1697 = vmatpush.msra.mxu0 %v1674
    %1698 = vmatmul.f32.gmra.mxu0 %v1672
    %v1699 = vpop.f32.mrf.mxu0
    %v1700 = vadd.f32 %v1661, %v1699
    %1701 = vdwg.mxu0
    %1702 = vmatpush.msra.mxu0 0.0
    %1703 = vmatpush.msra.mxu0 0.0
    %1704 = vmatpush.msra.mxu0 0.0
    %1705 = vmatpush.msra.mxu0 0.0
    %1706 = vmatpush.msra.mxu0 0.0
    %1707 = vmatpush.msra.mxu0 0.0
    %1708 = vmatpush.msra.mxu0 0.0
    %1709 = vmatpush.msra.mxu0 0.0
    %1710 = vmatpush.msra.mxu0 0.0
    %1711 = vmatpush.msra.mxu0 0.0
    %1712 = vmatpush.msra.mxu0 0.0
    %1713 = vmatpush.msra.mxu0 0.0
    %1714 = vmatpush.msra.mxu0 0.0
    %1715 = vmatpush.msra.mxu0 0.0
    %1716 = vmatpush.msra.mxu0 0.0
    %1717 = vmatpush.msra.mxu0 %v1676
    %1718 = vmatmul.f32.gmra.mxu0 %v1672
    %v1719 = vpop.f32.mrf.mxu0
    %v1720 = vadd.f32 %v1661, %v1719
    %1721 = vdwg.mxu0
    %1722 = vmatpush.msra.mxu0 0.0
    %1723 = vmatpush.msra.mxu0 0.0
    %1724 = vmatpush.msra.mxu0 0.0
    %1725 = vmatpush.msra.mxu0 0.0
    %1726 = vmatpush.msra.mxu0 0.0
    %1727 = vmatpush.msra.mxu0 0.0
    %1728 = vmatpush.msra.mxu0 0.0
    %1729 = vmatpush.msra.mxu0 0.0
    %1730 = vmatpush.msra.mxu0 0.0
    %1731 = vmatpush.msra.mxu0 0.0
    %1732 = vmatpush.msra.mxu0 0.0
    %1733 = vmatpush.msra.mxu0 0.0
    %1734 = vmatpush.msra.mxu0 0.0
    %1735 = vmatpush.msra.mxu0 0.0
    %1736 = vmatpush.msra.mxu0 0.0
    %1737 = vmatpush.msra.mxu0 %v1678
    %1738 = vmatmul.f32.gmra.mxu0 %v1672
    %v1739 = vpop.f32.mrf.mxu0
    %v1740 = vadd.f32 %v1661, %v1739
    %1741 = vdwg.mxu0
    %1742 = vmatpush.msra.mxu0 0.0
    %1743 = vmatpush.msra.mxu0 0.0
    %1744 = vmatpush.msra.mxu0 0.0
    %1745 = vmatpush.msra.mxu0 0.0
    %1746 = vmatpush.msra.mxu0 0.0
    %1747 = vmatpush.msra.mxu0 0.0
    %1748 = vmatpush.msra.mxu0 0.0
    %1749 = vmatpush.msra.mxu0 0.0
    %1750 = vmatpush.msra.mxu0 0.0
    %1751 = vmatpush.msra.mxu0 0.0
    %1752 = vmatpush.msra.mxu0 0.0
    %1753 = vmatpush.msra.mxu0 0.0
    %1754 = vmatpush.msra.mxu0 0.0
    %1755 = vmatpush.msra.mxu0 0.0
    %1756 = vmatpush.msra.mxu0 0.0
    %1757 = vmatpush.msra.mxu0 %v1680
    %1758 = vmatmul.f32.gmra.mxu0 %v1672
    %v1759 = vpop.f32.mrf.mxu0
    %v1760 = vadd.f32 %v1661, %v1759
    %1761 = vdwg.mxu0
    %v1762 = vadd.f32 %v1594, %v1700
    %v1763 = vadd.f32 %v1614, %v1720
    %v1764 = vadd.f32 %v1634, %v1740
    %v1765 = vadd.f32 %v1654, %v1760
    %1766 = vst [vmem:[#allocation10] sm:$0xff] %v1762
    %1767 = vst [vmem:[#allocation10 + $0x8] sm:$0xff] %v1763
    %1768 = vst [vmem:[#allocation10 + $0x10] sm:$0xff] %v1764
    %1769 = vst [vmem:[#allocation10 + $0x18] sm:$0xff] %v1765
    // Predicated region
    $region62: #{tpu_custom_call.1} parent=1 // pred_check
      _
    $region63: #{tpu_custom_call.1} parent=1 // pred_check_branch
      %1771 = sbr.rel (0) target = $region65
    $region64: #{tpu_custom_call.1} parent=1 // pred_region
      %1773 = vsyncadd [#allocation6], 0
      %s1775 = sshll.u32 [#allocation10], 4
      %s1776 = int_to_ptr.vmem [resolvable:$true] %s1775
      %s1777 = sshll.u32 %s12, 4
      %s1778 = int_to_ptr.hbm [resolvable:$true] %s1777
      %1780 = dma.vmem_to_hbm [thread:$0]  %s1776, 512, %s1778, [#allocation6]
    $region65: #{tpu_custom_call.1} parent=1 // pred_fallthru
      _
    // Predicated region
    $region66: #{tpu_custom_call.1} parent=1 // pred_check
      _
    $region67: #{tpu_custom_call.1} parent=1 // pred_check_branch
      %1782 = sbr.rel (0) target = $region69
    $region68: #{tpu_custom_call.1} parent=1 // pred_region
      %1784 = dma.done [#allocation6], 512
    $region69: #{tpu_custom_call.1} parent=1 // pred_fallthru
      _
    %1785 = vsyncpa [#allocation5], 1
    %1786 = vsyncpa [#allocation8], 1
    %1787 = vsyncpa [#allocation6], 1

</llo_original>
